<compile_context>
chip_gen: v6e
topology: v6e:2x2x1
jax: 0.10.0
libtpu: 0.0.40
codegen_flags: <defaults>
</compile_context>

<pallas_src>
import jax
import jax.numpy as jnp
from jax import lax
from jax.experimental import pallas as pl
from jax.experimental.pallas import tpu as pltpu


# ---------------- Pallas kernel (one batch element per grid step) ----------------

def cnn_branch_kernel(x_ref, s1r_ref, r1_ref, b1_ref, p1r_ref, p1c_ref,
                      s2r_ref, r2_ref, b2_ref, p2c_ref, o_ref):
    xb = x_ref[0]                                       # (32, 96)  [h, ci*32+w]

    # ---- conv1 (k3,s2,p1) + bias + ReLU  ->  (16, 96)  [ho, co*16+wo]
    acc1 = None
    for kh in range(3):
        t = jnp.dot(s1r_ref[kh], xb, preferred_element_type=jnp.float32)      # (16,96)
        t = jnp.dot(t, r1_ref[kh], preferred_element_type=jnp.float32)        # (16,96)
        acc1 = t if acc1 is None else acc1 + t
    h1 = jnp.maximum(acc1 + b1_ref[...], 0.0)

    # ---- maxpool1 (k3,s2)  ->  (7, 42)  [i, c*7+j]
    p1 = None
    for kh in range(3):
        a = jnp.dot(p1r_ref[kh], h1, preferred_element_type=jnp.float32)      # (7,96)
        for kw in range(3):
            tap = jnp.dot(a, p1c_ref[kw], preferred_element_type=jnp.float32)  # (7,42)
            p1 = tap if p1 is None else jnp.maximum(p1, tap)

    # ---- conv2 (k3,s2,p1) + bias + ReLU  ->  (4, 48)  [ho, co*4+wo]
    acc2 = None
    for kh in range(3):
        t = jnp.dot(s2r_ref[kh], p1, preferred_element_type=jnp.float32)      # (4,42)
        t = jnp.dot(t, r2_ref[kh], preferred_element_type=jnp.float32)        # (4,48)
        acc2 = t if acc2 is None else acc2 + t
    h2 = jnp.maximum(acc2 + b2_ref[...], 0.0)

    # ---- maxpool2 (k3,s2)  ->  (1, 12) == flattened output row
    top = h2[0:3, :]                                     # window rows 0..2
    m = None
    for kw in range(3):
        c = jnp.dot(top, p2c_ref[kw], preferred_element_type=jnp.float32)     # (3,12)
        m = c if m is None else jnp.maximum(m, c)
    o_ref[0] = jnp.max(m, axis=0, keepdims=True)         # (1,12)


# ---------------- wrapper: fold weights into selection matrices, one pallas_call ----

def _sel(n_out, n_in, k, pad):
    # S[o, i] = 1  iff  i == 2*o + k - pad   (rows that fall in padding are all-zero)
    o = jnp.arange(n_out, dtype=jnp.int32)[:, None]
    i = jnp.arange(n_in, dtype=jnp.int32)[None, :]
    return (i == (2 * o + k - pad)).astype(jnp.float32)


def cnn_branch(x, params):
    B = x.shape[0]
    f32 = jnp.float32
    w1 = params["w1"].astype(f32)
    b1 = params["b1"].astype(f32)
    w2 = params["w2"].astype(f32)
    b2 = params["b2"].astype(f32)

    # geometry: 32 -conv(s2,p1)-> 16 -pool(3,2)-> 7 -conv(s2,p1)-> 4 -pool(3,2)-> 1
    S1 = jnp.stack([_sel(16, 32, k, 1) for k in range(3)])                    # (3,16,32)
    P1r = jnp.stack([_sel(7, 16, k, 0) for k in range(3)])                    # (3,7,16)
    P1c = jnp.stack([jnp.kron(jnp.eye(6, dtype=f32), _sel(7, 16, k, 0).T)
                     for k in range(3)])                                      # (3,96,42)
    S2 = jnp.stack([_sel(4, 7, k, 1) for k in range(3)])                      # (3,4,7)
    P2c = jnp.stack([jnp.kron(jnp.eye(12, dtype=f32),
                              (jnp.arange(4) == k).astype(f32).reshape(4, 1))
                     for k in range(3)])                                      # (3,48,12)

    # fold conv weights + column selection + channel mixing into right matrices
    # R1[kh][ci*32+w, co*16+wo] = sum_kw w1[co,ci,kh,kw] * S1[kw][wo,w]
    R1 = jnp.stack([jnp.einsum("ock,kuw->cwou", w1[:, :, kh, :], S1).reshape(96, 96)
                    for kh in range(3)])                                      # (3,96,96)
    R2 = jnp.stack([jnp.einsum("ock,kuw->cwou", w2[:, :, kh, :], S2).reshape(42, 48)
                    for kh in range(3)])                                      # (3,42,48)
    b1cols = jnp.repeat(b1, 16).reshape(1, 96)
    b2cols = jnp.repeat(b2, 4).reshape(1, 48)

    # channels-on-lanes input layout: (B, H=32, Cin*W=96)
    x_in = jnp.transpose(x.astype(f32), (0, 2, 1, 3)).reshape(B, 32, 96)

    out = pl.pallas_call(
        cnn_branch_kernel,
        grid=(B,),
        out_shape=jax.ShapeDtypeStruct((B, 1, 12), f32),
        in_specs=[
            pl.BlockSpec((1, 32, 96), lambda b: (b, 0, 0)),    # x (per-batch)
            pl.BlockSpec((3, 16, 32), lambda b: (0, 0, 0)),    # S1 (conv1 row select)
            pl.BlockSpec((3, 96, 96), lambda b: (0, 0, 0)),    # R1 (conv1 folded weights)
            pl.BlockSpec((1, 96), lambda b: (0, 0)),           # bias1 (per-column)
            pl.BlockSpec((3, 7, 16), lambda b: (0, 0, 0)),     # pool1 row select
            pl.BlockSpec((3, 96, 42), lambda b: (0, 0, 0)),    # pool1 col select (block-diag)
            pl.BlockSpec((3, 4, 7), lambda b: (0, 0, 0)),      # S2 (conv2 row select)
            pl.BlockSpec((3, 42, 48), lambda b: (0, 0, 0)),    # R2 (conv2 folded weights)
            pl.BlockSpec((1, 48), lambda b: (0, 0)),           # bias2
            pl.BlockSpec((3, 48, 12), lambda b: (0, 0, 0)),    # pool2 col select
        ],
        out_specs=pl.BlockSpec((1, 1, 12), lambda b: (b, 0, 0)),
        compiler_params=pltpu.CompilerParams(
            dimension_semantics=("parallel",)),                # v7x: batch across 2 TCs
    )(x_in, S1, R1, b1cols, P1r, P1c, S2, R2, b2cols, P2c)

    return out.reshape(B, 12)                                  # == torch .view(B, -1)


# ---------------- pure-JAX reference (for correctness check) ----------------

def _ref_forward(x, params):
    dn = lax.conv_dimension_numbers(x.shape, params["w1"].shape, ("NCHW", "OIHW", "NCHW"))
    y = lax.conv_general_dilated(x, params["w1"], (2, 2), ((1, 1), (1, 1)),
                                 dimension_numbers=dn)
    y = jnp.maximum(y + params["b1"].reshape(1, -1, 1, 1), 0.0)
    y = lax.reduce_window(y, -jnp.inf, lax.max, (1, 1, 3, 3), (1, 1, 2, 2), "VALID")
    dn2 = lax.conv_dimension_numbers(y.shape, params["w2"].shape, ("NCHW", "OIHW", "NCHW"))
    y = lax.conv_general_dilated(y, params["w2"], (2, 2), ((1, 1), (1, 1)),
                                 dimension_numbers=dn2)
    y = jnp.maximum(y + params["b2"].reshape(1, -1, 1, 1), 0.0)
    y = lax.reduce_window(y, -jnp.inf, lax.max, (1, 1, 3, 3), (1, 1, 2, 2), "VALID")
    return y.reshape(y.shape[0], -1)


# ---------------- main ----------------

if __name__ == "__main__":
    key = jax.random.PRNGKey(0)
    kx, k1, k2, kb1, kb2 = jax.random.split(key, 5)

    def xavier_uniform(k, shape):
        fan_in = shape[1] * shape[2] * shape[3]
        fan_out = shape[0] * shape[2] * shape[3]
        lim = (6.0 / (fan_in + fan_out)) ** 0.5
        return jax.random.uniform(k, shape, jnp.float32, -lim, lim)

    params = {
        "w1": xavier_uniform(k1, (6, 3, 3, 3)),
        "b1": 0.1 * jax.random.normal(kb1, (6,), jnp.float32),
        "w2": xavier_uniform(k2, (12, 6, 3, 3)),
        "b2": 0.1 * jax.random.normal(kb2, (12,), jnp.float32),
    }

    B = 2
    x = jax.random.normal(kx, (B, 3, 32, 32), dtype=jnp.float32)
    # shape trace: 32 -> conv1(s2,p1) 16 -> pool(3,2) 7 -> conv2 4 -> pool 1 -> flatten 12

    out = jax.jit(cnn_branch)(x, params)
    jax.block_until_ready(out)
    assert out.shape == (B, 12), out.shape

    ref = _ref_forward(x, params)
    err = float(jnp.max(jnp.abs(out - ref)))
    assert err < 1e-3, f"max abs err {err}"
    print("KERNEL_OK")
</pallas_src>

<mosaic_0001>
module attributes {stable_mosaic.version = 11 : i64} {
  func.func @cnn_branch_kernel(%arg0: i32, %arg1: memref<1x32x96xf32, #tpu.memory_space<vmem>>, %arg2: memref<3x16x32xf32, #tpu.memory_space<vmem>>, %arg3: memref<3x96x96xf32, #tpu.memory_space<vmem>>, %arg4: memref<1x96xf32, #tpu.memory_space<vmem>>, %arg5: memref<3x7x16xf32, #tpu.memory_space<vmem>>, %arg6: memref<3x96x42xf32, #tpu.memory_space<vmem>>, %arg7: memref<3x4x7xf32, #tpu.memory_space<vmem>>, %arg8: memref<3x42x48xf32, #tpu.memory_space<vmem>>, %arg9: memref<1x48xf32, #tpu.memory_space<vmem>>, %arg10: memref<3x48x12xf32, #tpu.memory_space<vmem>>, %arg11: memref<1x1x12xf32, #tpu.memory_space<vmem>>) attributes {dimension_semantics = [#tpu.dimension_semantics<parallel>], iteration_bounds = array<i64: 2>, scalar_prefetch = 0 : i64, scratch_operands = 0 : i64, tpu.core_type = #tpu.core_type<tc>, window_params = [{transform_indices = @transform_0, window_bounds = array<i64: 1, 32, 96>}, {pipeline_mode = #tpu.pipeline_mode<synchronous>, transform_indices = @transform_1, window_bounds = array<i64: 3, 16, 32>}, {pipeline_mode = #tpu.pipeline_mode<synchronous>, transform_indices = @transform_2, window_bounds = array<i64: 3, 96, 96>}, {pipeline_mode = #tpu.pipeline_mode<synchronous>, transform_indices = @transform_3, window_bounds = array<i64: 1, 96>}, {pipeline_mode = #tpu.pipeline_mode<synchronous>, transform_indices = @transform_4, window_bounds = array<i64: 3, 7, 16>}, {pipeline_mode = #tpu.pipeline_mode<synchronous>, transform_indices = @transform_5, window_bounds = array<i64: 3, 96, 42>}, {pipeline_mode = #tpu.pipeline_mode<synchronous>, transform_indices = @transform_6, window_bounds = array<i64: 3, 4, 7>}, {pipeline_mode = #tpu.pipeline_mode<synchronous>, transform_indices = @transform_7, window_bounds = array<i64: 3, 42, 48>}, {pipeline_mode = #tpu.pipeline_mode<synchronous>, transform_indices = @transform_8, window_bounds = array<i64: 1, 48>}, {pipeline_mode = #tpu.pipeline_mode<synchronous>, transform_indices = @transform_9, window_bounds = array<i64: 3, 48, 12>}, {transform_indices = @transform_10, window_bounds = array<i64: 1, 1, 12>}]} {
    %c0 = arith.constant 0 : index
    %c0_0 = arith.constant 0 : index
    %c0_1 = arith.constant 0 : index
    %0 = vector.load %arg1[%c0, %c0_0, %c0_1] : memref<1x32x96xf32, #tpu.memory_space<vmem>>, vector<1x32x96xf32>
    %1 = vector.shape_cast %0 : vector<1x32x96xf32> to vector<32x96xf32>
    %c0_2 = arith.constant 0 : index
    %c0_3 = arith.constant 0 : index
    %c0_4 = arith.constant 0 : index
    %2 = vector.load %arg2[%c0_2, %c0_3, %c0_4] : memref<3x16x32xf32, #tpu.memory_space<vmem>>, vector<1x16x32xf32>
    %3 = vector.shape_cast %2 : vector<1x16x32xf32> to vector<16x32xf32>
    %cst = arith.constant dense<0.000000e+00> : vector<16x96xf32>
    %4 = tpu.matmul %3, %1, %cst {dimension_numbers = #tpu.dot_dimension_numbers<[1], [0], [0], [1], [0, 0, 1, 1], [], []>} : vector<16x32xf32>, vector<32x96xf32>, vector<16x96xf32> -> vector<16x96xf32>
    %c0_5 = arith.constant 0 : index
    %c0_6 = arith.constant 0 : index
    %c0_7 = arith.constant 0 : index
    %5 = vector.load %arg3[%c0_5, %c0_6, %c0_7] : memref<3x96x96xf32, #tpu.memory_space<vmem>>, vector<1x96x96xf32>
    %6 = vector.shape_cast %5 : vector<1x96x96xf32> to vector<96x96xf32>
    %cst_8 = arith.constant dense<0.000000e+00> : vector<16x96xf32>
    %7 = tpu.matmul %4, %6, %cst_8 {dimension_numbers = #tpu.dot_dimension_numbers<[1], [0], [0], [1], [0, 0, 1, 1], [], []>} : vector<16x96xf32>, vector<96x96xf32>, vector<16x96xf32> -> vector<16x96xf32>
    %c1 = arith.constant 1 : index
    %c0_9 = arith.constant 0 : index
    %c0_10 = arith.constant 0 : index
    %8 = vector.load %arg2[%c1, %c0_9, %c0_10] : memref<3x16x32xf32, #tpu.memory_space<vmem>>, vector<1x16x32xf32>
    %9 = vector.shape_cast %8 : vector<1x16x32xf32> to vector<16x32xf32>
    %cst_11 = arith.constant dense<0.000000e+00> : vector<16x96xf32>
    %10 = tpu.matmul %9, %1, %cst_11 {dimension_numbers = #tpu.dot_dimension_numbers<[1], [0], [0], [1], [0, 0, 1, 1], [], []>} : vector<16x32xf32>, vector<32x96xf32>, vector<16x96xf32> -> vector<16x96xf32>
    %c1_12 = arith.constant 1 : index
    %c0_13 = arith.constant 0 : index
    %c0_14 = arith.constant 0 : index
    %11 = vector.load %arg3[%c1_12, %c0_13, %c0_14] : memref<3x96x96xf32, #tpu.memory_space<vmem>>, vector<1x96x96xf32>
    %12 = vector.shape_cast %11 : vector<1x96x96xf32> to vector<96x96xf32>
    %cst_15 = arith.constant dense<0.000000e+00> : vector<16x96xf32>
    %13 = tpu.matmul %10, %12, %cst_15 {dimension_numbers = #tpu.dot_dimension_numbers<[1], [0], [0], [1], [0, 0, 1, 1], [], []>} : vector<16x96xf32>, vector<96x96xf32>, vector<16x96xf32> -> vector<16x96xf32>
    %14 = arith.addf %7, %13 : vector<16x96xf32>
    %c2 = arith.constant 2 : index
    %c0_16 = arith.constant 0 : index
    %c0_17 = arith.constant 0 : index
    %15 = vector.load %arg2[%c2, %c0_16, %c0_17] : memref<3x16x32xf32, #tpu.memory_space<vmem>>, vector<1x16x32xf32>
    %16 = vector.shape_cast %15 : vector<1x16x32xf32> to vector<16x32xf32>
    %cst_18 = arith.constant dense<0.000000e+00> : vector<16x96xf32>
    %17 = tpu.matmul %16, %1, %cst_18 {dimension_numbers = #tpu.dot_dimension_numbers<[1], [0], [0], [1], [0, 0, 1, 1], [], []>} : vector<16x32xf32>, vector<32x96xf32>, vector<16x96xf32> -> vector<16x96xf32>
    %c2_19 = arith.constant 2 : index
    %c0_20 = arith.constant 0 : index
    %c0_21 = arith.constant 0 : index
    %18 = vector.load %arg3[%c2_19, %c0_20, %c0_21] : memref<3x96x96xf32, #tpu.memory_space<vmem>>, vector<1x96x96xf32>
    %19 = vector.shape_cast %18 : vector<1x96x96xf32> to vector<96x96xf32>
    %cst_22 = arith.constant dense<0.000000e+00> : vector<16x96xf32>
    %20 = tpu.matmul %17, %19, %cst_22 {dimension_numbers = #tpu.dot_dimension_numbers<[1], [0], [0], [1], [0, 0, 1, 1], [], []>} : vector<16x96xf32>, vector<96x96xf32>, vector<16x96xf32> -> vector<16x96xf32>
    %21 = arith.addf %14, %20 : vector<16x96xf32>
    %c0_23 = arith.constant 0 : index
    %c0_24 = arith.constant 0 : index
    %22 = vector.load %arg4[%c0_23, %c0_24] : memref<1x96xf32, #tpu.memory_space<vmem>>, vector<1x96xf32>
    %23 = vector.broadcast %22 : vector<1x96xf32> to vector<16x96xf32>
    %24 = arith.addf %21, %23 : vector<16x96xf32>
    %cst_25 = arith.constant 0.000000e+00 : f32
    %25 = vector.broadcast %cst_25 : f32 to vector<16x96xf32>
    %26 = arith.maximumf %24, %25 : vector<16x96xf32>
    %c0_26 = arith.constant 0 : index
    %c0_27 = arith.constant 0 : index
    %c0_28 = arith.constant 0 : index
    %27 = vector.load %arg5[%c0_26, %c0_27, %c0_28] : memref<3x7x16xf32, #tpu.memory_space<vmem>>, vector<1x7x16xf32>
    %28 = vector.shape_cast %27 : vector<1x7x16xf32> to vector<7x16xf32>
    %cst_29 = arith.constant dense<0.000000e+00> : vector<7x96xf32>
    %29 = tpu.matmul %28, %26, %cst_29 {dimension_numbers = #tpu.dot_dimension_numbers<[1], [0], [0], [1], [0, 0, 1, 1], [], []>} : vector<7x16xf32>, vector<16x96xf32>, vector<7x96xf32> -> vector<7x96xf32>
    %c0_30 = arith.constant 0 : index
    %c0_31 = arith.constant 0 : index
    %c0_32 = arith.constant 0 : index
    %30 = vector.load %arg6[%c0_30, %c0_31, %c0_32] : memref<3x96x42xf32, #tpu.memory_space<vmem>>, vector<1x96x42xf32>
    %31 = vector.shape_cast %30 : vector<1x96x42xf32> to vector<96x42xf32>
    %cst_33 = arith.constant dense<0.000000e+00> : vector<7x42xf32>
    %32 = tpu.matmul %29, %31, %cst_33 {dimension_numbers = #tpu.dot_dimension_numbers<[1], [0], [0], [1], [0, 0, 1, 1], [], []>} : vector<7x96xf32>, vector<96x42xf32>, vector<7x42xf32> -> vector<7x42xf32>
    %c1_34 = arith.constant 1 : index
    %c0_35 = arith.constant 0 : index
    %c0_36 = arith.constant 0 : index
    %33 = vector.load %arg6[%c1_34, %c0_35, %c0_36] : memref<3x96x42xf32, #tpu.memory_space<vmem>>, vector<1x96x42xf32>
    %34 = vector.shape_cast %33 : vector<1x96x42xf32> to vector<96x42xf32>
    %cst_37 = arith.constant dense<0.000000e+00> : vector<7x42xf32>
    %35 = tpu.matmul %29, %34, %cst_37 {dimension_numbers = #tpu.dot_dimension_numbers<[1], [0], [0], [1], [0, 0, 1, 1], [], []>} : vector<7x96xf32>, vector<96x42xf32>, vector<7x42xf32> -> vector<7x42xf32>
    %36 = arith.maximumf %32, %35 : vector<7x42xf32>
    %c2_38 = arith.constant 2 : index
    %c0_39 = arith.constant 0 : index
    %c0_40 = arith.constant 0 : index
    %37 = vector.load %arg6[%c2_38, %c0_39, %c0_40] : memref<3x96x42xf32, #tpu.memory_space<vmem>>, vector<1x96x42xf32>
    %38 = vector.shape_cast %37 : vector<1x96x42xf32> to vector<96x42xf32>
    %cst_41 = arith.constant dense<0.000000e+00> : vector<7x42xf32>
    %39 = tpu.matmul %29, %38, %cst_41 {dimension_numbers = #tpu.dot_dimension_numbers<[1], [0], [0], [1], [0, 0, 1, 1], [], []>} : vector<7x96xf32>, vector<96x42xf32>, vector<7x42xf32> -> vector<7x42xf32>
    %40 = arith.maximumf %36, %39 : vector<7x42xf32>
    %c1_42 = arith.constant 1 : index
    %c0_43 = arith.constant 0 : index
    %c0_44 = arith.constant 0 : index
    %41 = vector.load %arg5[%c1_42, %c0_43, %c0_44] : memref<3x7x16xf32, #tpu.memory_space<vmem>>, vector<1x7x16xf32>
    %42 = vector.shape_cast %41 : vector<1x7x16xf32> to vector<7x16xf32>
    %cst_45 = arith.constant dense<0.000000e+00> : vector<7x96xf32>
    %43 = tpu.matmul %42, %26, %cst_45 {dimension_numbers = #tpu.dot_dimension_numbers<[1], [0], [0], [1], [0, 0, 1, 1], [], []>} : vector<7x16xf32>, vector<16x96xf32>, vector<7x96xf32> -> vector<7x96xf32>
    %c0_46 = arith.constant 0 : index
    %c0_47 = arith.constant 0 : index
    %c0_48 = arith.constant 0 : index
    %44 = vector.load %arg6[%c0_46, %c0_47, %c0_48] : memref<3x96x42xf32, #tpu.memory_space<vmem>>, vector<1x96x42xf32>
    %45 = vector.shape_cast %44 : vector<1x96x42xf32> to vector<96x42xf32>
    %cst_49 = arith.constant dense<0.000000e+00> : vector<7x42xf32>
    %46 = tpu.matmul %43, %45, %cst_49 {dimension_numbers = #tpu.dot_dimension_numbers<[1], [0], [0], [1], [0, 0, 1, 1], [], []>} : vector<7x96xf32>, vector<96x42xf32>, vector<7x42xf32> -> vector<7x42xf32>
    %47 = arith.maximumf %40, %46 : vector<7x42xf32>
    %c1_50 = arith.constant 1 : index
    %c0_51 = arith.constant 0 : index
    %c0_52 = arith.constant 0 : index
    %48 = vector.load %arg6[%c1_50, %c0_51, %c0_52] : memref<3x96x42xf32, #tpu.memory_space<vmem>>, vector<1x96x42xf32>
    %49 = vector.shape_cast %48 : vector<1x96x42xf32> to vector<96x42xf32>
    %cst_53 = arith.constant dense<0.000000e+00> : vector<7x42xf32>
    %50 = tpu.matmul %43, %49, %cst_53 {dimension_numbers = #tpu.dot_dimension_numbers<[1], [0], [0], [1], [0, 0, 1, 1], [], []>} : vector<7x96xf32>, vector<96x42xf32>, vector<7x42xf32> -> vector<7x42xf32>
    %51 = arith.maximumf %47, %50 : vector<7x42xf32>
    %c2_54 = arith.constant 2 : index
    %c0_55 = arith.constant 0 : index
    %c0_56 = arith.constant 0 : index
    %52 = vector.load %arg6[%c2_54, %c0_55, %c0_56] : memref<3x96x42xf32, #tpu.memory_space<vmem>>, vector<1x96x42xf32>
    %53 = vector.shape_cast %52 : vector<1x96x42xf32> to vector<96x42xf32>
    %cst_57 = arith.constant dense<0.000000e+00> : vector<7x42xf32>
    %54 = tpu.matmul %43, %53, %cst_57 {dimension_numbers = #tpu.dot_dimension_numbers<[1], [0], [0], [1], [0, 0, 1, 1], [], []>} : vector<7x96xf32>, vector<96x42xf32>, vector<7x42xf32> -> vector<7x42xf32>
    %55 = arith.maximumf %51, %54 : vector<7x42xf32>
    %c2_58 = arith.constant 2 : index
    %c0_59 = arith.constant 0 : index
    %c0_60 = arith.constant 0 : index
    %56 = vector.load %arg5[%c2_58, %c0_59, %c0_60] : memref<3x7x16xf32, #tpu.memory_space<vmem>>, vector<1x7x16xf32>
    %57 = vector.shape_cast %56 : vector<1x7x16xf32> to vector<7x16xf32>
    %cst_61 = arith.constant dense<0.000000e+00> : vector<7x96xf32>
    %58 = tpu.matmul %57, %26, %cst_61 {dimension_numbers = #tpu.dot_dimension_numbers<[1], [0], [0], [1], [0, 0, 1, 1], [], []>} : vector<7x16xf32>, vector<16x96xf32>, vector<7x96xf32> -> vector<7x96xf32>
    %c0_62 = arith.constant 0 : index
    %c0_63 = arith.constant 0 : index
    %c0_64 = arith.constant 0 : index
    %59 = vector.load %arg6[%c0_62, %c0_63, %c0_64] : memref<3x96x42xf32, #tpu.memory_space<vmem>>, vector<1x96x42xf32>
    %60 = vector.shape_cast %59 : vector<1x96x42xf32> to vector<96x42xf32>
    %cst_65 = arith.constant dense<0.000000e+00> : vector<7x42xf32>
    %61 = tpu.matmul %58, %60, %cst_65 {dimension_numbers = #tpu.dot_dimension_numbers<[1], [0], [0], [1], [0, 0, 1, 1], [], []>} : vector<7x96xf32>, vector<96x42xf32>, vector<7x42xf32> -> vector<7x42xf32>
    %62 = arith.maximumf %55, %61 : vector<7x42xf32>
    %c1_66 = arith.constant 1 : index
    %c0_67 = arith.constant 0 : index
    %c0_68 = arith.constant 0 : index
    %63 = vector.load %arg6[%c1_66, %c0_67, %c0_68] : memref<3x96x42xf32, #tpu.memory_space<vmem>>, vector<1x96x42xf32>
    %64 = vector.shape_cast %63 : vector<1x96x42xf32> to vector<96x42xf32>
    %cst_69 = arith.constant dense<0.000000e+00> : vector<7x42xf32>
    %65 = tpu.matmul %58, %64, %cst_69 {dimension_numbers = #tpu.dot_dimension_numbers<[1], [0], [0], [1], [0, 0, 1, 1], [], []>} : vector<7x96xf32>, vector<96x42xf32>, vector<7x42xf32> -> vector<7x42xf32>
    %66 = arith.maximumf %62, %65 : vector<7x42xf32>
    %c2_70 = arith.constant 2 : index
    %c0_71 = arith.constant 0 : index
    %c0_72 = arith.constant 0 : index
    %67 = vector.load %arg6[%c2_70, %c0_71, %c0_72] : memref<3x96x42xf32, #tpu.memory_space<vmem>>, vector<1x96x42xf32>
    %68 = vector.shape_cast %67 : vector<1x96x42xf32> to vector<96x42xf32>
    %cst_73 = arith.constant dense<0.000000e+00> : vector<7x42xf32>
    %69 = tpu.matmul %58, %68, %cst_73 {dimension_numbers = #tpu.dot_dimension_numbers<[1], [0], [0], [1], [0, 0, 1, 1], [], []>} : vector<7x96xf32>, vector<96x42xf32>, vector<7x42xf32> -> vector<7x42xf32>
    %70 = arith.maximumf %66, %69 : vector<7x42xf32>
    %c0_74 = arith.constant 0 : index
    %c0_75 = arith.constant 0 : index
    %c0_76 = arith.constant 0 : index
    %71 = vector.load %arg7[%c0_74, %c0_75, %c0_76] : memref<3x4x7xf32, #tpu.memory_space<vmem>>, vector<1x4x7xf32>
    %72 = vector.shape_cast %71 : vector<1x4x7xf32> to vector<4x7xf32>
    %cst_77 = arith.constant dense<0.000000e+00> : vector<4x42xf32>
    %73 = tpu.matmul %72, %70, %cst_77 {dimension_numbers = #tpu.dot_dimension_numbers<[1], [0], [0], [1], [0, 0, 1, 1], [], []>} : vector<4x7xf32>, vector<7x42xf32>, vector<4x42xf32> -> vector<4x42xf32>
    %c0_78 = arith.constant 0 : index
    %c0_79 = arith.constant 0 : index
    %c0_80 = arith.constant 0 : index
    %74 = vector.load %arg8[%c0_78, %c0_79, %c0_80] : memref<3x42x48xf32, #tpu.memory_space<vmem>>, vector<1x42x48xf32>
    %75 = vector.shape_cast %74 : vector<1x42x48xf32> to vector<42x48xf32>
    %cst_81 = arith.constant dense<0.000000e+00> : vector<4x48xf32>
    %76 = tpu.matmul %73, %75, %cst_81 {dimension_numbers = #tpu.dot_dimension_numbers<[1], [0], [0], [1], [0, 0, 1, 1], [], []>} : vector<4x42xf32>, vector<42x48xf32>, vector<4x48xf32> -> vector<4x48xf32>
    %c1_82 = arith.constant 1 : index
    %c0_83 = arith.constant 0 : index
    %c0_84 = arith.constant 0 : index
    %77 = vector.load %arg7[%c1_82, %c0_83, %c0_84] : memref<3x4x7xf32, #tpu.memory_space<vmem>>, vector<1x4x7xf32>
    %78 = vector.shape_cast %77 : vector<1x4x7xf32> to vector<4x7xf32>
    %cst_85 = arith.constant dense<0.000000e+00> : vector<4x42xf32>
    %79 = tpu.matmul %78, %70, %cst_85 {dimension_numbers = #tpu.dot_dimension_numbers<[1], [0], [0], [1], [0, 0, 1, 1], [], []>} : vector<4x7xf32>, vector<7x42xf32>, vector<4x42xf32> -> vector<4x42xf32>
    %c1_86 = arith.constant 1 : index
    %c0_87 = arith.constant 0 : index
    %c0_88 = arith.constant 0 : index
    %80 = vector.load %arg8[%c1_86, %c0_87, %c0_88] : memref<3x42x48xf32, #tpu.memory_space<vmem>>, vector<1x42x48xf32>
    %81 = vector.shape_cast %80 : vector<1x42x48xf32> to vector<42x48xf32>
    %cst_89 = arith.constant dense<0.000000e+00> : vector<4x48xf32>
    %82 = tpu.matmul %79, %81, %cst_89 {dimension_numbers = #tpu.dot_dimension_numbers<[1], [0], [0], [1], [0, 0, 1, 1], [], []>} : vector<4x42xf32>, vector<42x48xf32>, vector<4x48xf32> -> vector<4x48xf32>
    %83 = arith.addf %76, %82 : vector<4x48xf32>
    %c2_90 = arith.constant 2 : index
    %c0_91 = arith.constant 0 : index
    %c0_92 = arith.constant 0 : index
    %84 = vector.load %arg7[%c2_90, %c0_91, %c0_92] : memref<3x4x7xf32, #tpu.memory_space<vmem>>, vector<1x4x7xf32>
    %85 = vector.shape_cast %84 : vector<1x4x7xf32> to vector<4x7xf32>
    %cst_93 = arith.constant dense<0.000000e+00> : vector<4x42xf32>
    %86 = tpu.matmul %85, %70, %cst_93 {dimension_numbers = #tpu.dot_dimension_numbers<[1], [0], [0], [1], [0, 0, 1, 1], [], []>} : vector<4x7xf32>, vector<7x42xf32>, vector<4x42xf32> -> vector<4x42xf32>
    %c2_94 = arith.constant 2 : index
    %c0_95 = arith.constant 0 : index
    %c0_96 = arith.constant 0 : index
    %87 = vector.load %arg8[%c2_94, %c0_95, %c0_96] : memref<3x42x48xf32, #tpu.memory_space<vmem>>, vector<1x42x48xf32>
    %88 = vector.shape_cast %87 : vector<1x42x48xf32> to vector<42x48xf32>
    %cst_97 = arith.constant dense<0.000000e+00> : vector<4x48xf32>
    %89 = tpu.matmul %86, %88, %cst_97 {dimension_numbers = #tpu.dot_dimension_numbers<[1], [0], [0], [1], [0, 0, 1, 1], [], []>} : vector<4x42xf32>, vector<42x48xf32>, vector<4x48xf32> -> vector<4x48xf32>
    %90 = arith.addf %83, %89 : vector<4x48xf32>
    %c0_98 = arith.constant 0 : index
    %c0_99 = arith.constant 0 : index
    %91 = vector.load %arg9[%c0_98, %c0_99] : memref<1x48xf32, #tpu.memory_space<vmem>>, vector<1x48xf32>
    %92 = vector.broadcast %91 : vector<1x48xf32> to vector<4x48xf32>
    %93 = arith.addf %90, %92 : vector<4x48xf32>
    %cst_100 = arith.constant 0.000000e+00 : f32
    %94 = vector.broadcast %cst_100 : f32 to vector<4x48xf32>
    %95 = arith.maximumf %93, %94 : vector<4x48xf32>
    %96 = vector.extract_strided_slice %95 {offsets = [0, 0], sizes = [3, 48], strides = [1, 1]} : vector<4x48xf32> to vector<3x48xf32>
    %c0_101 = arith.constant 0 : index
    %c0_102 = arith.constant 0 : index
    %c0_103 = arith.constant 0 : index
    %97 = vector.load %arg10[%c0_101, %c0_102, %c0_103] : memref<3x48x12xf32, #tpu.memory_space<vmem>>, vector<1x48x12xf32>
    %98 = vector.shape_cast %97 : vector<1x48x12xf32> to vector<48x12xf32>
    %cst_104 = arith.constant dense<0.000000e+00> : vector<3x12xf32>
    %99 = tpu.matmul %96, %98, %cst_104 {dimension_numbers = #tpu.dot_dimension_numbers<[1], [0], [0], [1], [0, 0, 1, 1], [], []>} : vector<3x48xf32>, vector<48x12xf32>, vector<3x12xf32> -> vector<3x12xf32>
    %c1_105 = arith.constant 1 : index
    %c0_106 = arith.constant 0 : index
    %c0_107 = arith.constant 0 : index
    %100 = vector.load %arg10[%c1_105, %c0_106, %c0_107] : memref<3x48x12xf32, #tpu.memory_space<vmem>>, vector<1x48x12xf32>
    %101 = vector.shape_cast %100 : vector<1x48x12xf32> to vector<48x12xf32>
    %cst_108 = arith.constant dense<0.000000e+00> : vector<3x12xf32>
    %102 = tpu.matmul %96, %101, %cst_108 {dimension_numbers = #tpu.dot_dimension_numbers<[1], [0], [0], [1], [0, 0, 1, 1], [], []>} : vector<3x48xf32>, vector<48x12xf32>, vector<3x12xf32> -> vector<3x12xf32>
    %103 = arith.maximumf %99, %102 : vector<3x12xf32>
    %c2_109 = arith.constant 2 : index
    %c0_110 = arith.constant 0 : index
    %c0_111 = arith.constant 0 : index
    %104 = vector.load %arg10[%c2_109, %c0_110, %c0_111] : memref<3x48x12xf32, #tpu.memory_space<vmem>>, vector<1x48x12xf32>
    %105 = vector.shape_cast %104 : vector<1x48x12xf32> to vector<48x12xf32>
    %cst_112 = arith.constant dense<0.000000e+00> : vector<3x12xf32>
    %106 = tpu.matmul %96, %105, %cst_112 {dimension_numbers = #tpu.dot_dimension_numbers<[1], [0], [0], [1], [0, 0, 1, 1], [], []>} : vector<3x48xf32>, vector<48x12xf32>, vector<3x12xf32> -> vector<3x12xf32>
    %107 = arith.maximumf %103, %106 : vector<3x12xf32>
    %cst_113 = arith.constant dense<0xFF800000> : vector<12xf32>
    %108 = vector.multi_reduction <maximumf>, %107, %cst_113 [0] : vector<3x12xf32> to vector<12xf32>
    %109 = vector.shape_cast %108 : vector<12xf32> to vector<1x12xf32>
    %c0_114 = arith.constant 0 : index
    %c0_115 = arith.constant 0 : index
    %c0_116 = arith.constant 0 : index
    %110 = vector.load %arg11[%c0_114, %c0_115, %c0_116] : memref<1x1x12xf32, #tpu.memory_space<vmem>>, vector<1x1x12xf32>
    %111 = vector.shape_cast %110 : vector<1x1x12xf32> to vector<1x12xf32>
    %112 = vector.shape_cast %109 : vector<1x12xf32> to vector<1x1x12xf32>
    tpu.vector_store %arg11[%c0_114, %c0_115, %c0_116], %112 {strides = array<i32>} : memref<1x1x12xf32, #tpu.memory_space<vmem>>, vector<1x1x12xf32>,
    return
  }
  func.func @transform_0(%arg0: i32) -> (i32, i32, i32) {
    %c0_i32 = arith.constant 0 : i32
    %c0_i32_0 = arith.constant 0 : i32
    %c0_i32_1 = arith.constant 0 : i32
    return %arg0, %c0_i32, %c0_i32_0 : i32, i32, i32
  }
  func.func @transform_1(%arg0: i32) -> (i32, i32, i32) {
    %c0_i32 = arith.constant 0 : i32
    %c0_i32_0 = arith.constant 0 : i32
    %c0_i32_1 = arith.constant 0 : i32
    %c0_i32_2 = arith.constant 0 : i32
    return %c0_i32, %c0_i32_0, %c0_i32_1 : i32, i32, i32
  }
  func.func @transform_2(%arg0: i32) -> (i32, i32, i32) {
    %c0_i32 = arith.constant 0 : i32
    %c0_i32_0 = arith.constant 0 : i32
    %c0_i32_1 = arith.constant 0 : i32
    %c0_i32_2 = arith.constant 0 : i32
    return %c0_i32, %c0_i32_0, %c0_i32_1 : i32, i32, i32
  }
  func.func @transform_3(%arg0: i32) -> (i32, i32) {
    %c0_i32 = arith.constant 0 : i32
    %c0_i32_0 = arith.constant 0 : i32
    %c0_i32_1 = arith.constant 0 : i32
    return %c0_i32, %c0_i32_0 : i32, i32
  }
  func.func @transform_4(%arg0: i32) -> (i32, i32, i32) {
    %c0_i32 = arith.constant 0 : i32
    %c0_i32_0 = arith.constant 0 : i32
    %c0_i32_1 = arith.constant 0 : i32
    %c0_i32_2 = arith.constant 0 : i32
    return %c0_i32, %c0_i32_0, %c0_i32_1 : i32, i32, i32
  }
  func.func @transform_5(%arg0: i32) -> (i32, i32, i32) {
    %c0_i32 = arith.constant 0 : i32
    %c0_i32_0 = arith.constant 0 : i32
    %c0_i32_1 = arith.constant 0 : i32
    %c0_i32_2 = arith.constant 0 : i32
    return %c0_i32, %c0_i32_0, %c0_i32_1 : i32, i32, i32
  }
  func.func @transform_6(%arg0: i32) -> (i32, i32, i32) {
    %c0_i32 = arith.constant 0 : i32
    %c0_i32_0 = arith.constant 0 : i32
    %c0_i32_1 = arith.constant 0 : i32
    %c0_i32_2 = arith.constant 0 : i32
    return %c0_i32, %c0_i32_0, %c0_i32_1 : i32, i32, i32
  }
  func.func @transform_7(%arg0: i32) -> (i32, i32, i32) {
    %c0_i32 = arith.constant 0 : i32
    %c0_i32_0 = arith.constant 0 : i32
    %c0_i32_1 = arith.constant 0 : i32
    %c0_i32_2 = arith.constant 0 : i32
    return %c0_i32, %c0_i32_0, %c0_i32_1 : i32, i32, i32
  }
  func.func @transform_8(%arg0: i32) -> (i32, i32) {
    %c0_i32 = arith.constant 0 : i32
    %c0_i32_0 = arith.constant 0 : i32
    %c0_i32_1 = arith.constant 0 : i32
    return %c0_i32, %c0_i32_0 : i32, i32
  }
  func.func @transform_9(%arg0: i32) -> (i32, i32, i32) {
    %c0_i32 = arith.constant 0 : i32
    %c0_i32_0 = arith.constant 0 : i32
    %c0_i32_1 = arith.constant 0 : i32
    %c0_i32_2 = arith.constant 0 : i32
    return %c0_i32, %c0_i32_0, %c0_i32_1 : i32, i32, i32
  }
  func.func @transform_10(%arg0: i32) -> (i32, i32, i32) {
    %c0_i32 = arith.constant 0 : i32
    %c0_i32_0 = arith.constant 0 : i32
    %c0_i32_1 = arith.constant 0 : i32
    return %arg0, %c0_i32, %c0_i32_0 : i32, i32, i32
  }
}

</mosaic_0001>

<llo_original>
// kernel: cnn_branch.1
$region0: #{cnn_branch.1}
  #allocation0 [shape = 'u32[]', space=smem, size = 0x4, offset = 0x4, fixed_abs, tag = 'smem constant byte address 0x4 - core index']
  #allocation1 [shape = 'u32[144,128]{1,0:T(1,128)}', space=vmem, size = 0x12000, scoped, tag = 'internal scratch']
  %s0 = inlined_call_operand.vmem [shape: f32[2,32,96], index: 0, kind: input, shape index: {}]
  %s1 = inlined_call_operand.vmem [shape: f32[3,16,32], index: 1, kind: input, shape index: {}]
  %s2 = inlined_call_operand.vmem [shape: f32[3,96,96], index: 2, kind: input, shape index: {}]
  %s3 = inlined_call_operand.vmem [shape: f32[1,96], index: 3, kind: input, shape index: {}]
  %s4 = inlined_call_operand.vmem [shape: f32[3,7,16], index: 4, kind: input, shape index: {}]
  %s5 = inlined_call_operand.vmem [shape: f32[3,96,42], index: 5, kind: input, shape index: {}]
  %s6 = inlined_call_operand.vmem [shape: f32[3,4,7], index: 6, kind: input, shape index: {}]
  %s7 = inlined_call_operand.vmem [shape: f32[3,42,48], index: 7, kind: input, shape index: {}]
  %s8 = inlined_call_operand.vmem [shape: f32[1,48], index: 8, kind: input, shape index: {}]
  %s9 = inlined_call_operand.vmem [shape: f32[3,48,12], index: 9, kind: input, shape index: {}]
  %s10 = inlined_call_operand.hbm [shape: f32[2,1,12], index: 10, kind: output, shape index: {}]
  %s11 = sld [smem:[#allocation0]]
  $region73: #{cnn_branch.1} parent=0
    _
  %s13 = ssub.s32 1, %s11
  %s14 = scalar_select 0, %s13, %s11
  $region1: #{cnn_branch.1} parent=0
    #allocation2 [shape = 'u8[1024]{0}', space=vmem, size = 0x400, scoped, tag = 'output window, operand 0']
    #allocation3 [shape = 's32[2]{0}', space=sflag, size = 0x8, scoped, tag = 'scoped memory for cnn_branch.1']
    %15 = vsyncpa [#allocation3], 0
    %s16 = scalar_lea.sflag [#allocation3], 1
    %17 = vsyncpa %s16, 0
    loop: start=0, step=1, limit=4
    $region2: #{cnn_branch.1} parent=1 // loop_pre_header
      _
    $region3: #{cnn_branch.1} parent=1 // loop_header
      %s19 = sphi 0, %s23
      %p20 = scmp.ge.s32.totalorder %s19, 4
      %s29 = sphi 0, %s31
      %s32 = sphi 0, %s29
      %s33 = sphi 0, %s32
      %s49 = sphi 0, %s33
      %s53 = sphi 0, %s53
      %s55 = sphi 0, %s53
      %s56 = sphi 0, %s55
      %s70 = sphi 0, %s56
      %s74 = sphi 0, %s74
      %s76 = sphi 0, %s74
      %s77 = sphi 0, %s76
      %s91 = sphi 0, %s77
      %s95 = sphi 0, %s95
      %s97 = sphi 0, %s95
      %s98 = sphi 0, %s97
      %s112 = sphi 0, %s98
      %s116 = sphi 0, %s116
      %s118 = sphi 0, %s116
      %s119 = sphi 0, %s118
      %s133 = sphi 0, %s119
      %s137 = sphi 0, %s137
      %s139 = sphi 0, %s137
      %s140 = sphi 0, %s139
      %s154 = sphi 0, %s140
      %s158 = sphi 0, %s158
      %s160 = sphi 0, %s158
      %s161 = sphi 0, %s160
      %s175 = sphi 0, %s161
      %s179 = sphi 0, %s179
      %s181 = sphi 0, %s179
      %s182 = sphi 0, %s181
      %s196 = sphi 0, %s182
      %s200 = sphi 0, %s200
      %s202 = sphi 0, %s200
      %s203 = sphi 0, %s202
      %s217 = sphi 0, %s203
      %s221 = sphi 0, %s221
      %s223 = sphi 0, %s221
      %s224 = sphi 0, %s223
      %s238 = sphi 0, %s224
      %s244 = sphi 0, %s246
      %s247 = sphi 0, %s244
      %s248 = sphi 0, %s247
      %s264 = sphi 0, %s248
    $region4: #{cnn_branch.1} parent=1 // loop_header_branch
      %22 = sbr.rel (%p20) target = $region8
    $region5: #{cnn_branch.1} parent=1 // loop_body
      %s24 = ssub.s32 %s19, 1
      %s25 = ssub.s32 %s19, 2
      %s26 = sadd.s32 %s19, 1
      %s27 = ssub.s32 %s19, %s26
      %p28 = scmp.eq.s32.totalorder %s27, 0
      %s30 = sadd.s32 %s29, 1
      %s31 = scalar_select %p28, %s29, %s30
      %p34 = pneg %p28
      %p35 = scmp.eq.s32.totalorder %s19, 1
      %p36 = por %p34, %p35
      %p37 = scmp.ne.s32.totalorder %s29, %s32
      %p38 = scmp.eq.s32.totalorder %s19, 0
      %p39 = por %p37, %p38
      %p40 = scmp.ne.s32.totalorder %s29, %s32
      %p41 = scmp.eq.s32.totalorder %s24, 1
      %p42 = por %p40, %p41
      %p43 = scmp.ne.s32.totalorder %s32, %s33
      %p44 = scmp.eq.s32.totalorder %s24, 0
      %p45 = por %p43, %p44
      %p46 = scmp.ne.s32.totalorder %s32, %s33
      %p47 = scmp.eq.s32.totalorder %s25, 1
      %p48 = por %p46, %p47
      %p50 = scmp.ne.s32.totalorder %s33, %s49
      %p51 = scmp.eq.s32.totalorder %s25, 0
      %p52 = por %p50, %p51
      %s54 = sadd.s32 %s53, 1
      %p57 = scmp.eq.s32.totalorder %s19, 1
      %p58 = scmp.ne.s32.totalorder %s53, %s55
      %p59 = scmp.eq.s32.totalorder %s19, 0
      %p60 = por %p58, %p59
      %p61 = scmp.ne.s32.totalorder %s53, %s55
      %p62 = scmp.eq.s32.totalorder %s24, 1
      %p63 = por %p61, %p62
      %p64 = scmp.ne.s32.totalorder %s55, %s56
      %p65 = scmp.eq.s32.totalorder %s24, 0
      %p66 = por %p64, %p65
      %p67 = scmp.ne.s32.totalorder %s55, %s56
      %p68 = scmp.eq.s32.totalorder %s25, 1
      %p69 = por %p67, %p68
      %p71 = scmp.ne.s32.totalorder %s56, %s70
      %p72 = scmp.eq.s32.totalorder %s25, 0
      %p73 = por %p71, %p72
      %s75 = sadd.s32 %s74, 1
      %p78 = scmp.eq.s32.totalorder %s19, 1
      %p79 = scmp.ne.s32.totalorder %s74, %s76
      %p80 = scmp.eq.s32.totalorder %s19, 0
      %p81 = por %p79, %p80
      %p82 = scmp.ne.s32.totalorder %s74, %s76
      %p83 = scmp.eq.s32.totalorder %s24, 1
      %p84 = por %p82, %p83
      %p85 = scmp.ne.s32.totalorder %s76, %s77
      %p86 = scmp.eq.s32.totalorder %s24, 0
      %p87 = por %p85, %p86
      %p88 = scmp.ne.s32.totalorder %s76, %s77
      %p89 = scmp.eq.s32.totalorder %s25, 1
      %p90 = por %p88, %p89
      %p92 = scmp.ne.s32.totalorder %s77, %s91
      %p93 = scmp.eq.s32.totalorder %s25, 0
      %p94 = por %p92, %p93
      %s96 = sadd.s32 %s95, 1
      %p99 = scmp.eq.s32.totalorder %s19, 1
      %p100 = scmp.ne.s32.totalorder %s95, %s97
      %p101 = scmp.eq.s32.totalorder %s19, 0
      %p102 = por %p100, %p101
      %p103 = scmp.ne.s32.totalorder %s95, %s97
      %p104 = scmp.eq.s32.totalorder %s24, 1
      %p105 = por %p103, %p104
      %p106 = scmp.ne.s32.totalorder %s97, %s98
      %p107 = scmp.eq.s32.totalorder %s24, 0
      %p108 = por %p106, %p107
      %p109 = scmp.ne.s32.totalorder %s97, %s98
      %p110 = scmp.eq.s32.totalorder %s25, 1
      %p111 = por %p109, %p110
      %p113 = scmp.ne.s32.totalorder %s98, %s112
      %p114 = scmp.eq.s32.totalorder %s25, 0
      %p115 = por %p113, %p114
      %s117 = sadd.s32 %s116, 1
      %p120 = scmp.eq.s32.totalorder %s19, 1
      %p121 = scmp.ne.s32.totalorder %s116, %s118
      %p122 = scmp.eq.s32.totalorder %s19, 0
      %p123 = por %p121, %p122
      %p124 = scmp.ne.s32.totalorder %s116, %s118
      %p125 = scmp.eq.s32.totalorder %s24, 1
      %p126 = por %p124, %p125
      %p127 = scmp.ne.s32.totalorder %s118, %s119
      %p128 = scmp.eq.s32.totalorder %s24, 0
      %p129 = por %p127, %p128
      %p130 = scmp.ne.s32.totalorder %s118, %s119
      %p131 = scmp.eq.s32.totalorder %s25, 1
      %p132 = por %p130, %p131
      %p134 = scmp.ne.s32.totalorder %s119, %s133
      %p135 = scmp.eq.s32.totalorder %s25, 0
      %p136 = por %p134, %p135
      %s138 = sadd.s32 %s137, 1
      %p141 = scmp.eq.s32.totalorder %s19, 1
      %p142 = scmp.ne.s32.totalorder %s137, %s139
      %p143 = scmp.eq.s32.totalorder %s19, 0
      %p144 = por %p142, %p143
      %p145 = scmp.ne.s32.totalorder %s137, %s139
      %p146 = scmp.eq.s32.totalorder %s24, 1
      %p147 = por %p145, %p146
      %p148 = scmp.ne.s32.totalorder %s139, %s140
      %p149 = scmp.eq.s32.totalorder %s24, 0
      %p150 = por %p148, %p149
      %p151 = scmp.ne.s32.totalorder %s139, %s140
      %p152 = scmp.eq.s32.totalorder %s25, 1
      %p153 = por %p151, %p152
      %p155 = scmp.ne.s32.totalorder %s140, %s154
      %p156 = scmp.eq.s32.totalorder %s25, 0
      %p157 = por %p155, %p156
      %s159 = sadd.s32 %s158, 1
      %p162 = scmp.eq.s32.totalorder %s19, 1
      %p163 = scmp.ne.s32.totalorder %s158, %s160
      %p164 = scmp.eq.s32.totalorder %s19, 0
      %p165 = por %p163, %p164
      %p166 = scmp.ne.s32.totalorder %s158, %s160
      %p167 = scmp.eq.s32.totalorder %s24, 1
      %p168 = por %p166, %p167
      %p169 = scmp.ne.s32.totalorder %s160, %s161
      %p170 = scmp.eq.s32.totalorder %s24, 0
      %p171 = por %p169, %p170
      %p172 = scmp.ne.s32.totalorder %s160, %s161
      %p173 = scmp.eq.s32.totalorder %s25, 1
      %p174 = por %p172, %p173
      %p176 = scmp.ne.s32.totalorder %s161, %s175
      %p177 = scmp.eq.s32.totalorder %s25, 0
      %p178 = por %p176, %p177
      %s180 = sadd.s32 %s179, 1
      %p183 = scmp.eq.s32.totalorder %s19, 1
      %p184 = scmp.ne.s32.totalorder %s179, %s181
      %p185 = scmp.eq.s32.totalorder %s19, 0
      %p186 = por %p184, %p185
      %p187 = scmp.ne.s32.totalorder %s179, %s181
      %p188 = scmp.eq.s32.totalorder %s24, 1
      %p189 = por %p187, %p188
      %p190 = scmp.ne.s32.totalorder %s181, %s182
      %p191 = scmp.eq.s32.totalorder %s24, 0
      %p192 = por %p190, %p191
      %p193 = scmp.ne.s32.totalorder %s181, %s182
      %p194 = scmp.eq.s32.totalorder %s25, 1
      %p195 = por %p193, %p194
      %p197 = scmp.ne.s32.totalorder %s182, %s196
      %p198 = scmp.eq.s32.totalorder %s25, 0
      %p199 = por %p197, %p198
      %s201 = sadd.s32 %s200, 1
      %p204 = scmp.eq.s32.totalorder %s19, 1
      %p205 = scmp.ne.s32.totalorder %s200, %s202
      %p206 = scmp.eq.s32.totalorder %s19, 0
      %p207 = por %p205, %p206
      %p208 = scmp.ne.s32.totalorder %s200, %s202
      %p209 = scmp.eq.s32.totalorder %s24, 1
      %p210 = por %p208, %p209
      %p211 = scmp.ne.s32.totalorder %s202, %s203
      %p212 = scmp.eq.s32.totalorder %s24, 0
      %p213 = por %p211, %p212
      %p214 = scmp.ne.s32.totalorder %s202, %s203
      %p215 = scmp.eq.s32.totalorder %s25, 1
      %p216 = por %p214, %p215
      %p218 = scmp.ne.s32.totalorder %s203, %s217
      %p219 = scmp.eq.s32.totalorder %s25, 0
      %p220 = por %p218, %p219
      %s222 = sadd.s32 %s221, 1
      %p225 = scmp.eq.s32.totalorder %s19, 1
      %p226 = scmp.ne.s32.totalorder %s221, %s223
      %p227 = scmp.eq.s32.totalorder %s19, 0
      %p228 = por %p226, %p227
      %p229 = scmp.ne.s32.totalorder %s221, %s223
      %p230 = scmp.eq.s32.totalorder %s24, 1
      %p231 = por %p229, %p230
      %p232 = scmp.ne.s32.totalorder %s223, %s224
      %p233 = scmp.eq.s32.totalorder %s24, 0
      %p234 = por %p232, %p233
      %p235 = scmp.ne.s32.totalorder %s223, %s224
      %p236 = scmp.eq.s32.totalorder %s25, 1
      %p237 = por %p235, %p236
      %p239 = scmp.ne.s32.totalorder %s224, %s238
      %p240 = scmp.eq.s32.totalorder %s25, 0
      %p241 = por %p239, %p240
      %s242 = ssub.s32 %s19, %s26
      %p243 = scmp.eq.s32.totalorder %s242, 0
      %s245 = sadd.s32 %s244, 1
      %s246 = scalar_select %p243, %s244, %s245
      %p249 = pneg %p243
      %p250 = scmp.eq.s32.totalorder %s19, 1
      %p251 = por %p249, %p250
      %p252 = scmp.ne.s32.totalorder %s244, %s247
      %p253 = scmp.eq.s32.totalorder %s19, 0
      %p254 = por %p252, %p253
      %p255 = scmp.ne.s32.totalorder %s244, %s247
      %p256 = scmp.eq.s32.totalorder %s24, 1
      %p257 = por %p255, %p256
      %p258 = scmp.ne.s32.totalorder %s247, %s248
      %p259 = scmp.eq.s32.totalorder %s24, 0
      %p260 = por %p258, %p259
      %p261 = scmp.ne.s32.totalorder %s247, %s248
      %p262 = scmp.eq.s32.totalorder %s25, 1
      %p263 = por %p261, %p262
      %p265 = scmp.ne.s32.totalorder %s248, %s264
      %p266 = scmp.eq.s32.totalorder %s25, 0
      %p267 = por %p265, %p266
      %p268 = scmp.le.s32.totalorder 1, %s19
      %p269 = scmp.lt.s32.totalorder %s19, 3
      %p270 = pnand %p268, %p269
      %p271 = pneg %p270
      // Predicated region
      $region9: #{cnn_branch.1} parent=5 // pred_check
        _
      $region10: #{cnn_branch.1} parent=5 // pred_check_branch
        %273 = sbr.rel (%p270) target = $region12
      $region11: #{cnn_branch.1} parent=5 // pred_region
        %s274 = ssub.s32 %s19, 1
        // Predicated region
        $region13: #{cnn_branch.1} parent=11 // pred_check
          %p275 = pneg %p66
        $region14: #{cnn_branch.1} parent=11 // pred_check_branch
          %277 = sbr.rel (%p275) target = $region16
        $region15: #{cnn_branch.1} parent=11 // pred_region
          _
        $region16: #{cnn_branch.1} parent=11 // pred_fallthru
          _
        // Predicated region
        $region17: #{cnn_branch.1} parent=11 // pred_check
          %p278 = pneg %p87
        $region18: #{cnn_branch.1} parent=11 // pred_check_branch
          %280 = sbr.rel (%p278) target = $region20
        $region19: #{cnn_branch.1} parent=11 // pred_region
          _
        $region20: #{cnn_branch.1} parent=11 // pred_fallthru
          _
        // Predicated region
        $region21: #{cnn_branch.1} parent=11 // pred_check
          %p281 = pneg %p108
        $region22: #{cnn_branch.1} parent=11 // pred_check_branch
          %283 = sbr.rel (%p281) target = $region24
        $region23: #{cnn_branch.1} parent=11 // pred_region
          _
        $region24: #{cnn_branch.1} parent=11 // pred_fallthru
          _
        // Predicated region
        $region25: #{cnn_branch.1} parent=11 // pred_check
          %p284 = pneg %p129
        $region26: #{cnn_branch.1} parent=11 // pred_check_branch
          %286 = sbr.rel (%p284) target = $region28
        $region27: #{cnn_branch.1} parent=11 // pred_region
          _
        $region28: #{cnn_branch.1} parent=11 // pred_fallthru
          _
        // Predicated region
        $region29: #{cnn_branch.1} parent=11 // pred_check
          %p287 = pneg %p150
        $region30: #{cnn_branch.1} parent=11 // pred_check_branch
          %289 = sbr.rel (%p287) target = $region32
        $region31: #{cnn_branch.1} parent=11 // pred_region
          _
        $region32: #{cnn_branch.1} parent=11 // pred_fallthru
          _
        // Predicated region
        $region33: #{cnn_branch.1} parent=11 // pred_check
          %p290 = pneg %p171
        $region34: #{cnn_branch.1} parent=11 // pred_check_branch
          %292 = sbr.rel (%p290) target = $region36
        $region35: #{cnn_branch.1} parent=11 // pred_region
          _
        $region36: #{cnn_branch.1} parent=11 // pred_fallthru
          _
        // Predicated region
        $region37: #{cnn_branch.1} parent=11 // pred_check
          %p293 = pneg %p192
        $region38: #{cnn_branch.1} parent=11 // pred_check_branch
          %295 = sbr.rel (%p293) target = $region40
        $region39: #{cnn_branch.1} parent=11 // pred_region
          _
        $region40: #{cnn_branch.1} parent=11 // pred_fallthru
          _
        // Predicated region
        $region41: #{cnn_branch.1} parent=11 // pred_check
          %p296 = pneg %p213
        $region42: #{cnn_branch.1} parent=11 // pred_check_branch
          %298 = sbr.rel (%p296) target = $region44
        $region43: #{cnn_branch.1} parent=11 // pred_region
          _
        $region44: #{cnn_branch.1} parent=11 // pred_fallthru
          _
        // Predicated region
        $region45: #{cnn_branch.1} parent=11 // pred_check
          %p299 = pneg %p234
        $region46: #{cnn_branch.1} parent=11 // pred_check_branch
          %301 = sbr.rel (%p299) target = $region48
        $region47: #{cnn_branch.1} parent=11 // pred_region
          _
        $region48: #{cnn_branch.1} parent=11 // pred_fallthru
          _
      $region12: #{cnn_branch.1} parent=5 // pred_fallthru
        _
      %p302 = scmp.lt.s32.totalorder %s19, 2
      // Predicated region
      $region49: #{cnn_branch.1} parent=5 // pred_check
        %p303 = pneg %p302
      $region50: #{cnn_branch.1} parent=5 // pred_check_branch
        %305 = sbr.rel (%p303) target = $region52
      $region51: #{cnn_branch.1} parent=5 // pred_region
        // Predicated region
        $region53: #{cnn_branch.1} parent=51 // pred_check
          %p306 = pneg %p39
        $region54: #{cnn_branch.1} parent=51 // pred_check_branch
          %308 = sbr.rel (%p306) target = $region56
        $region55: #{cnn_branch.1} parent=51 // pred_region
          %p309 = scmp.lt.s32.totalorder %s19, 1
          %s310 = scalar_select %p309, %s19, 1
          %s311 = smul.addr %s310, 4
          %s312 = smul.addr %s311, 8
          %s313 = scalar_lea.vmem %s0, %s312
        $region56: #{cnn_branch.1} parent=51 // pred_fallthru
          _
      $region52: #{cnn_branch.1} parent=5 // pred_fallthru
        _
      %p314 = scmp.le.s32.totalorder 1, %s19
      %p315 = scmp.lt.s32.totalorder %s19, 3
      %p316 = pnand %p314, %p315
      %p317 = pneg %p316
      // Predicated region
      $region57: #{cnn_branch.1} parent=5 // pred_check
        _
      $region58: #{cnn_branch.1} parent=5 // pred_check_branch
        %319 = sbr.rel (%p316) target = $region60
      $region59: #{cnn_branch.1} parent=5 // pred_region
        %s320 = ssub.s32 %s19, 1
        %p321 = scmp.lt.s32.totalorder %s24, 1
        %s322 = scalar_select %p321, %s24, 1
        %s323 = smul.addr %s322, 4
        %s324 = smul.addr %s323, 8
        %s325 = scalar_lea.vmem %s0, %s324
        %p326 = pneg %p45
        %p327 = pneg %p42
        %p328 = pneg %p66
        %p329 = pneg %p63
        %p330 = pneg %p87
        %p331 = pneg %p84
        %p332 = pneg %p108
        %p333 = pneg %p105
        %p334 = pneg %p129
        %p335 = pneg %p126
        %p336 = pneg %p150
        %p337 = pneg %p147
        %p338 = pneg %p171
        %p339 = pneg %p168
        %p340 = pneg %p192
        %p341 = pneg %p189
        %p342 = pneg %p213
        %p343 = pneg %p210
        %p344 = pneg %p234
        %p345 = pneg %p231
        %p346 = pneg %p260
        %p347 = pneg %p257
        %s348 = sand.u32 %s247, 1
        %s349 = scalar_lea.sflag [#allocation3], %s348
        %s350 = sand.u32 %s247, 1
        %s351 = scalar_lea.vmem [#allocation2], %s350
        %p352 = scmp.lt.s32.totalorder %s24, 1
        %s353 = scalar_select %p352, %s24, 1
        %s354 = smul.addr %s353, 4
        %s355 = smul.addr %s354, 8
        %s356 = scalar_lea.vmem %s0, %s355
        %v357 = vld [vmem:[%s356] sm:$0xff]
        %v358 = vld [vmem:[%s356 + $0x8] sm:$0xff]
        %v359 = vld [vmem:[%s356 + $0x10] sm:$0xff]
        %v360 = vld [vmem:[%s356 + $0x18] sm:$0xff]
        %v361 = vld [vmem:[%s1] sm:$0xff]
        %v362 = vld [vmem:[%s1 + $0x8] sm:$0xff]
        %vm363 = vcmask 261120
        %v365 = vsel %vm363, %v361, 0
        %v368 = vsel %vm363, %v362, 0
        %370 = vmatprep.subr.mxu0 0.0
        %371 = vmatpush1.msra.mxu0 0.0
        %372 = vmatprep.subr.mxu0 0.0
        %373 = vmatpush1.msra.mxu0 0.0
        %374 = vmatprep.subr.mxu0 0.0
        %375 = vmatpush1.msra.mxu0 0.0
        %376 = vmatprep.subr.mxu0 0.0
        %377 = vmatpush1.msra.mxu0 0.0
        %378 = vmatprep.subr.mxu0 0.0
        %379 = vmatpush1.msra.mxu0 0.0
        %380 = vmatprep.subr.mxu0 0.0
        %381 = vmatpush1.msra.mxu0 0.0
        %382 = vmatprep.subr.mxu0 0.0
        %383 = vmatpush1.msra.mxu0 0.0
        %384 = vmatprep.subr.mxu0 0.0
        %385 = vmatpush1.msra.mxu0 0.0
        %386 = vmatprep.subr.mxu0 0.0
        %387 = vmatpush1.msra.mxu0 0.0
        %388 = vmatprep.subr.mxu0 0.0
        %389 = vmatpush1.msra.mxu0 0.0
        %390 = vmatprep.subr.mxu0 0.0
        %391 = vmatpush1.msra.mxu0 0.0
        %392 = vmatprep.subr.mxu0 0.0
        %393 = vmatpush1.msra.mxu0 0.0
        %394 = vmatprep.subr.mxu0 0.0
        %395 = vmatpush1.msra.mxu0 %v360
        %396 = vmatprep.subr.mxu0 0.0
        %397 = vmatpush1.msra.mxu0 %v359
        %398 = vmatprep.subr.mxu0 0.0
        %399 = vmatpush1.msra.mxu0 %v358
        %400 = vmatprep.subr.mxu0 0.0
        %401 = vmatpush1.msra.mxu0 %v357
        %402 = vmatprep.subr.mxu0 0.0
        %403 = vmatpush2.msra.mxu0 0.0
        %404 = vmatprep.subr.mxu0 0.0
        %405 = vmatpush2.msra.mxu0 0.0
        %406 = vmatprep.subr.mxu0 0.0
        %407 = vmatpush2.msra.mxu0 0.0
        %408 = vmatprep.subr.mxu0 0.0
        %409 = vmatpush2.msra.mxu0 0.0
        %410 = vmatprep.subr.mxu0 0.0
        %411 = vmatpush2.msra.mxu0 0.0
        %412 = vmatprep.subr.mxu0 0.0
        %413 = vmatpush2.msra.mxu0 0.0
        %414 = vmatprep.subr.mxu0 0.0
        %415 = vmatpush2.msra.mxu0 0.0
        %416 = vmatprep.subr.mxu0 0.0
        %417 = vmatpush2.msra.mxu0 0.0
        %418 = vmatprep.subr.mxu0 0.0
        %419 = vmatpush2.msra.mxu0 0.0
        %420 = vmatprep.subr.mxu0 0.0
        %421 = vmatpush2.msra.mxu0 0.0
        %422 = vmatprep.subr.mxu0 0.0
        %423 = vmatpush2.msra.mxu0 0.0
        %424 = vmatprep.subr.mxu0 0.0
        %425 = vmatpush2.msra.mxu0 0.0
        %426 = vmatprep.subr.mxu0 0.0
        %427 = vmatpush2.msra.mxu0 0.0
        %428 = vmatprep.subr.mxu0 0.0
        %429 = vmatpush2.msra.mxu0 0.0
        %430 = vmatprep.subr.mxu0 0.0
        %431 = vmatpush2.msra.mxu0 0.0
        %432 = vmatprep.subr.mxu0 0.0
        %433 = vmatpush2.msra.mxu0 0.0
        %434 = vmatprep.mubr.f32.mxu0 0.0
        %435 = vmatmul.mubr.f32.gmra.mxu0 %v365
        %v436 = vpop.f32.mrf.mxu0
        %v437 = vadd.f32 0.0, %v436
        %v438 = vpop.f32.mrf.mxu0
        %439 = vmatprep.mubr.f32.mxu0 0.0
        %440 = vmatmul.mubr.f32.gmra.mxu0 %v368
        %v441 = vpop.f32.mrf.mxu0
        %v442 = vadd.f32 0.0, %v441
        %v443 = vpop.f32.mrf.mxu0
        %444 = vdwg.mxu0
        %v445 = vld [vmem:[%s2] sm:$0xff]
        %v446 = vld [vmem:[%s2 + $0x8] sm:$0xff]
        %v447 = vld [vmem:[%s2 + $0x10] sm:$0xff]
        %v448 = vld [vmem:[%s2 + $0x18] sm:$0xff]
        %v449 = vld [vmem:[%s2 + $0x20] sm:$0xff]
        %v450 = vld [vmem:[%s2 + $0x28] sm:$0xff]
        %v451 = vld [vmem:[%s2 + $0x30] sm:$0xff]
        %v452 = vld [vmem:[%s2 + $0x38] sm:$0xff]
        %v453 = vld [vmem:[%s2 + $0x40] sm:$0xff]
        %v454 = vld [vmem:[%s2 + $0x48] sm:$0xff]
        %v455 = vld [vmem:[%s2 + $0x50] sm:$0xff]
        %v456 = vld [vmem:[%s2 + $0x58] sm:$0xff]
        %s457 = scalar_lea.vmem %s1, 16
        %v458 = vld [vmem:[%s457] sm:$0xff]
        %v459 = vld [vmem:[%s457 + $0x8] sm:$0xff]
        %v461 = vsel %vm363, %v458, 0
        %v464 = vsel %vm363, %v459, 0
        %466 = vmatprep.subr.mxu0 0.0
        %467 = vmatpush1.msra.mxu0 0.0
        %468 = vmatprep.subr.mxu0 0.0
        %469 = vmatpush1.msra.mxu0 0.0
        %470 = vmatprep.subr.mxu0 0.0
        %471 = vmatpush1.msra.mxu0 0.0
        %472 = vmatprep.subr.mxu0 0.0
        %473 = vmatpush1.msra.mxu0 0.0
        %474 = vmatprep.subr.mxu0 0.0
        %475 = vmatpush1.msra.mxu0 0.0
        %476 = vmatprep.subr.mxu0 0.0
        %477 = vmatpush1.msra.mxu0 0.0
        %478 = vmatprep.subr.mxu0 0.0
        %479 = vmatpush1.msra.mxu0 0.0
        %480 = vmatprep.subr.mxu0 0.0
        %481 = vmatpush1.msra.mxu0 0.0
        %482 = vmatprep.subr.mxu0 0.0
        %483 = vmatpush1.msra.mxu0 0.0
        %484 = vmatprep.subr.mxu0 0.0
        %485 = vmatpush1.msra.mxu0 0.0
        %486 = vmatprep.subr.mxu0 0.0
        %487 = vmatpush1.msra.mxu0 0.0
        %488 = vmatprep.subr.mxu0 0.0
        %489 = vmatpush1.msra.mxu0 0.0
        %490 = vmatprep.subr.mxu0 0.0
        %491 = vmatpush1.msra.mxu0 %v360
        %492 = vmatprep.subr.mxu0 0.0
        %493 = vmatpush1.msra.mxu0 %v359
        %494 = vmatprep.subr.mxu0 0.0
        %495 = vmatpush1.msra.mxu0 %v358
        %496 = vmatprep.subr.mxu0 0.0
        %497 = vmatpush1.msra.mxu0 %v357
        %498 = vmatprep.subr.mxu0 0.0
        %499 = vmatpush2.msra.mxu0 0.0
        %500 = vmatprep.subr.mxu0 0.0
        %501 = vmatpush2.msra.mxu0 0.0
        %502 = vmatprep.subr.mxu0 0.0
        %503 = vmatpush2.msra.mxu0 0.0
        %504 = vmatprep.subr.mxu0 0.0
        %505 = vmatpush2.msra.mxu0 0.0
        %506 = vmatprep.subr.mxu0 0.0
        %507 = vmatpush2.msra.mxu0 0.0
        %508 = vmatprep.subr.mxu0 0.0
        %509 = vmatpush2.msra.mxu0 0.0
        %510 = vmatprep.subr.mxu0 0.0
        %511 = vmatpush2.msra.mxu0 0.0
        %512 = vmatprep.subr.mxu0 0.0
        %513 = vmatpush2.msra.mxu0 0.0
        %514 = vmatprep.subr.mxu0 0.0
        %515 = vmatpush2.msra.mxu0 0.0
        %516 = vmatprep.subr.mxu0 0.0
        %517 = vmatpush2.msra.mxu0 0.0
        %518 = vmatprep.subr.mxu0 0.0
        %519 = vmatpush2.msra.mxu0 0.0
        %520 = vmatprep.subr.mxu0 0.0
        %521 = vmatpush2.msra.mxu0 0.0
        %522 = vmatprep.subr.mxu0 0.0
        %523 = vmatpush2.msra.mxu0 0.0
        %524 = vmatprep.subr.mxu0 0.0
        %525 = vmatpush2.msra.mxu0 0.0
        %526 = vmatprep.subr.mxu0 0.0
        %527 = vmatpush2.msra.mxu0 0.0
        %528 = vmatprep.subr.mxu0 0.0
        %529 = vmatpush2.msra.mxu0 0.0
        %530 = vmatprep.mubr.f32.mxu0 0.0
        %531 = vmatmul.mubr.f32.gmra.mxu0 %v461
        %v532 = vpop.f32.mrf.mxu0
        %v533 = vadd.f32 0.0, %v532
        %v534 = vpop.f32.mrf.mxu0
        %535 = vmatprep.mubr.f32.mxu0 0.0
        %536 = vmatmul.mubr.f32.gmra.mxu0 %v464
        %v537 = vpop.f32.mrf.mxu0
        %v538 = vadd.f32 0.0, %v537
        %v539 = vpop.f32.mrf.mxu0
        %540 = vdwg.mxu0
        %s541 = scalar_lea.vmem %s2, 96
        %v542 = vld [vmem:[%s541] sm:$0xff]
        %v543 = vld [vmem:[%s541 + $0x8] sm:$0xff]
        %v544 = vld [vmem:[%s541 + $0x10] sm:$0xff]
        %v545 = vld [vmem:[%s541 + $0x18] sm:$0xff]
        %v546 = vld [vmem:[%s541 + $0x20] sm:$0xff]
        %v547 = vld [vmem:[%s541 + $0x28] sm:$0xff]
        %v548 = vld [vmem:[%s541 + $0x30] sm:$0xff]
        %v549 = vld [vmem:[%s541 + $0x38] sm:$0xff]
        %v550 = vld [vmem:[%s541 + $0x40] sm:$0xff]
        %v551 = vld [vmem:[%s541 + $0x48] sm:$0xff]
        %v552 = vld [vmem:[%s541 + $0x50] sm:$0xff]
        %v553 = vld [vmem:[%s541 + $0x58] sm:$0xff]
        %vm554 = vcmask 785408
        %v556 = vsel %vm554, %v533, 0
        %v559 = vsel %vm554, %v538, 0
        %561 = vmatprep.subr.mxu0 0.0
        %562 = vmatpush1.msra.mxu0 0.0
        %563 = vmatprep.subr.mxu0 0.0
        %564 = vmatpush1.msra.mxu0 0.0
        %565 = vmatprep.subr.mxu0 0.0
        %566 = vmatpush1.msra.mxu0 0.0
        %567 = vmatprep.subr.mxu0 0.0
        %568 = vmatpush1.msra.mxu0 0.0
        %569 = vmatprep.subr.mxu0 0.0
        %570 = vmatpush1.msra.mxu0 %v553
        %571 = vmatprep.subr.mxu0 0.0
        %572 = vmatpush1.msra.mxu0 %v552
        %573 = vmatprep.subr.mxu0 0.0
        %574 = vmatpush1.msra.mxu0 %v551
        %575 = vmatprep.subr.mxu0 0.0
        %576 = vmatpush1.msra.mxu0 %v550
        %577 = vmatprep.subr.mxu0 0.0
        %578 = vmatpush1.msra.mxu0 %v549
        %579 = vmatprep.subr.mxu0 0.0
        %580 = vmatpush1.msra.mxu0 %v548
        %581 = vmatprep.subr.mxu0 0.0
        %582 = vmatpush1.msra.mxu0 %v547
        %583 = vmatprep.subr.mxu0 0.0
        %584 = vmatpush1.msra.mxu0 %v546
        %585 = vmatprep.subr.mxu0 0.0
        %586 = vmatpush1.msra.mxu0 %v545
        %587 = vmatprep.subr.mxu0 0.0
        %588 = vmatpush1.msra.mxu0 %v544
        %589 = vmatprep.subr.mxu0 0.0
        %590 = vmatpush1.msra.mxu0 %v543
        %591 = vmatprep.subr.mxu0 0.0
        %592 = vmatpush1.msra.mxu0 %v542
        %593 = vmatprep.subr.mxu0 0.0
        %594 = vmatpush2.msra.mxu0 0.0
        %595 = vmatprep.subr.mxu0 0.0
        %596 = vmatpush2.msra.mxu0 0.0
        %597 = vmatprep.subr.mxu0 0.0
        %598 = vmatpush2.msra.mxu0 0.0
        %599 = vmatprep.subr.mxu0 0.0
        %600 = vmatpush2.msra.mxu0 0.0
        %601 = vmatprep.subr.mxu0 0.0
        %602 = vmatpush2.msra.mxu0 0.0
        %603 = vmatprep.subr.mxu0 0.0
        %604 = vmatpush2.msra.mxu0 0.0
        %605 = vmatprep.subr.mxu0 0.0
        %606 = vmatpush2.msra.mxu0 0.0
        %607 = vmatprep.subr.mxu0 0.0
        %608 = vmatpush2.msra.mxu0 0.0
        %609 = vmatprep.subr.mxu0 0.0
        %610 = vmatpush2.msra.mxu0 0.0
        %611 = vmatprep.subr.mxu0 0.0
        %612 = vmatpush2.msra.mxu0 0.0
        %613 = vmatprep.subr.mxu0 0.0
        %614 = vmatpush2.msra.mxu0 0.0
        %615 = vmatprep.subr.mxu0 0.0
        %616 = vmatpush2.msra.mxu0 0.0
        %617 = vmatprep.subr.mxu0 0.0
        %618 = vmatpush2.msra.mxu0 0.0
        %619 = vmatprep.subr.mxu0 0.0
        %620 = vmatpush2.msra.mxu0 0.0
        %621 = vmatprep.subr.mxu0 0.0
        %622 = vmatpush2.msra.mxu0 0.0
        %623 = vmatprep.subr.mxu0 0.0
        %624 = vmatpush2.msra.mxu0 0.0
        %625 = vmatprep.mubr.f32.mxu0 0.0
        %626 = vmatmul.mubr.f32.gmra.mxu0 %v556
        %v627 = vpop.f32.mrf.mxu0
        %v628 = vadd.f32 0.0, %v627
        %v629 = vpop.f32.mrf.mxu0
        %630 = vmatprep.mubr.f32.mxu0 0.0
        %631 = vmatmul.mubr.f32.gmra.mxu0 %v559
        %v632 = vpop.f32.mrf.mxu0
        %v633 = vadd.f32 0.0, %v632
        %v634 = vpop.f32.mrf.mxu0
        %635 = vdwg.mxu0
        %v637 = vsel %vm554, %v437, 0
        %v640 = vsel %vm554, %v442, 0
        %642 = vmatprep.subr.mxu0 0.0
        %643 = vmatpush1.msra.mxu0 0.0
        %644 = vmatprep.subr.mxu0 0.0
        %645 = vmatpush1.msra.mxu0 0.0
        %646 = vmatprep.subr.mxu0 0.0
        %647 = vmatpush1.msra.mxu0 0.0
        %648 = vmatprep.subr.mxu0 0.0
        %649 = vmatpush1.msra.mxu0 0.0
        %650 = vmatprep.subr.mxu0 0.0
        %651 = vmatpush1.msra.mxu0 %v456
        %652 = vmatprep.subr.mxu0 0.0
        %653 = vmatpush1.msra.mxu0 %v455
        %654 = vmatprep.subr.mxu0 0.0
        %655 = vmatpush1.msra.mxu0 %v454
        %656 = vmatprep.subr.mxu0 0.0
        %657 = vmatpush1.msra.mxu0 %v453
        %658 = vmatprep.subr.mxu0 0.0
        %659 = vmatpush1.msra.mxu0 %v452
        %660 = vmatprep.subr.mxu0 0.0
        %661 = vmatpush1.msra.mxu0 %v451
        %662 = vmatprep.subr.mxu0 0.0
        %663 = vmatpush1.msra.mxu0 %v450
        %664 = vmatprep.subr.mxu0 0.0
        %665 = vmatpush1.msra.mxu0 %v449
        %666 = vmatprep.subr.mxu0 0.0
        %667 = vmatpush1.msra.mxu0 %v448
        %668 = vmatprep.subr.mxu0 0.0
        %669 = vmatpush1.msra.mxu0 %v447
        %670 = vmatprep.subr.mxu0 0.0
        %671 = vmatpush1.msra.mxu0 %v446
        %672 = vmatprep.subr.mxu0 0.0
        %673 = vmatpush1.msra.mxu0 %v445
        %674 = vmatprep.subr.mxu0 0.0
        %675 = vmatpush2.msra.mxu0 0.0
        %676 = vmatprep.subr.mxu0 0.0
        %677 = vmatpush2.msra.mxu0 0.0
        %678 = vmatprep.subr.mxu0 0.0
        %679 = vmatpush2.msra.mxu0 0.0
        %680 = vmatprep.subr.mxu0 0.0
        %681 = vmatpush2.msra.mxu0 0.0
        %682 = vmatprep.subr.mxu0 0.0
        %683 = vmatpush2.msra.mxu0 0.0
        %684 = vmatprep.subr.mxu0 0.0
        %685 = vmatpush2.msra.mxu0 0.0
        %686 = vmatprep.subr.mxu0 0.0
        %687 = vmatpush2.msra.mxu0 0.0
        %688 = vmatprep.subr.mxu0 0.0
        %689 = vmatpush2.msra.mxu0 0.0
        %690 = vmatprep.subr.mxu0 0.0
        %691 = vmatpush2.msra.mxu0 0.0
        %692 = vmatprep.subr.mxu0 0.0
        %693 = vmatpush2.msra.mxu0 0.0
        %694 = vmatprep.subr.mxu0 0.0
        %695 = vmatpush2.msra.mxu0 0.0
        %696 = vmatprep.subr.mxu0 0.0
        %697 = vmatpush2.msra.mxu0 0.0
        %698 = vmatprep.subr.mxu0 0.0
        %699 = vmatpush2.msra.mxu0 0.0
        %700 = vmatprep.subr.mxu0 0.0
        %701 = vmatpush2.msra.mxu0 0.0
        %702 = vmatprep.subr.mxu0 0.0
        %703 = vmatpush2.msra.mxu0 0.0
        %704 = vmatprep.subr.mxu0 0.0
        %705 = vmatpush2.msra.mxu0 0.0
        %706 = vmatprep.mubr.f32.mxu0 0.0
        %707 = vmatmul.mubr.f32.gmra.mxu0 %v637
        %v708 = vpop.f32.mrf.mxu0
        %v709 = vadd.f32 %v628, %v708
        %v710 = vpop.f32.mrf.mxu0
        %711 = vmatprep.mubr.f32.mxu0 0.0
        %712 = vmatmul.mubr.f32.gmra.mxu0 %v640
        %v713 = vpop.f32.mrf.mxu0
        %v714 = vadd.f32 %v633, %v713
        %v715 = vpop.f32.mrf.mxu0
        %716 = vdwg.mxu0
        %s717 = scalar_lea.vmem %s1, 32
        %v718 = vld [vmem:[%s717] sm:$0xff]
        %v719 = vld [vmem:[%s717 + $0x8] sm:$0xff]
        %v721 = vsel %vm363, %v718, 0
        %v724 = vsel %vm363, %v719, 0
        %726 = vmatprep.subr.mxu0 0.0
        %727 = vmatpush1.msra.mxu0 0.0
        %728 = vmatprep.subr.mxu0 0.0
        %729 = vmatpush1.msra.mxu0 0.0
        %730 = vmatprep.subr.mxu0 0.0
        %731 = vmatpush1.msra.mxu0 0.0
        %732 = vmatprep.subr.mxu0 0.0
        %733 = vmatpush1.msra.mxu0 0.0
        %734 = vmatprep.subr.mxu0 0.0
        %735 = vmatpush1.msra.mxu0 0.0
        %736 = vmatprep.subr.mxu0 0.0
        %737 = vmatpush1.msra.mxu0 0.0
        %738 = vmatprep.subr.mxu0 0.0
        %739 = vmatpush1.msra.mxu0 0.0
        %740 = vmatprep.subr.mxu0 0.0
        %741 = vmatpush1.msra.mxu0 0.0
        %742 = vmatprep.subr.mxu0 0.0
        %743 = vmatpush1.msra.mxu0 0.0
        %744 = vmatprep.subr.mxu0 0.0
        %745 = vmatpush1.msra.mxu0 0.0
        %746 = vmatprep.subr.mxu0 0.0
        %747 = vmatpush1.msra.mxu0 0.0
        %748 = vmatprep.subr.mxu0 0.0
        %749 = vmatpush1.msra.mxu0 0.0
        %750 = vmatprep.subr.mxu0 0.0
        %751 = vmatpush1.msra.mxu0 %v360
        %752 = vmatprep.subr.mxu0 0.0
        %753 = vmatpush1.msra.mxu0 %v359
        %754 = vmatprep.subr.mxu0 0.0
        %755 = vmatpush1.msra.mxu0 %v358
        %756 = vmatprep.subr.mxu0 0.0
        %757 = vmatpush1.msra.mxu0 %v357
        %758 = vmatprep.subr.mxu0 0.0
        %759 = vmatpush2.msra.mxu0 0.0
        %760 = vmatprep.subr.mxu0 0.0
        %761 = vmatpush2.msra.mxu0 0.0
        %762 = vmatprep.subr.mxu0 0.0
        %763 = vmatpush2.msra.mxu0 0.0
        %764 = vmatprep.subr.mxu0 0.0
        %765 = vmatpush2.msra.mxu0 0.0
        %766 = vmatprep.subr.mxu0 0.0
        %767 = vmatpush2.msra.mxu0 0.0
        %768 = vmatprep.subr.mxu0 0.0
        %769 = vmatpush2.msra.mxu0 0.0
        %770 = vmatprep.subr.mxu0 0.0
        %771 = vmatpush2.msra.mxu0 0.0
        %772 = vmatprep.subr.mxu0 0.0
        %773 = vmatpush2.msra.mxu0 0.0
        %774 = vmatprep.subr.mxu0 0.0
        %775 = vmatpush2.msra.mxu0 0.0
        %776 = vmatprep.subr.mxu0 0.0
        %777 = vmatpush2.msra.mxu0 0.0
        %778 = vmatprep.subr.mxu0 0.0
        %779 = vmatpush2.msra.mxu0 0.0
        %780 = vmatprep.subr.mxu0 0.0
        %781 = vmatpush2.msra.mxu0 0.0
        %782 = vmatprep.subr.mxu0 0.0
        %783 = vmatpush2.msra.mxu0 0.0
        %784 = vmatprep.subr.mxu0 0.0
        %785 = vmatpush2.msra.mxu0 0.0
        %786 = vmatprep.subr.mxu0 0.0
        %787 = vmatpush2.msra.mxu0 0.0
        %788 = vmatprep.subr.mxu0 0.0
        %789 = vmatpush2.msra.mxu0 0.0
        %790 = vmatprep.mubr.f32.mxu0 0.0
        %791 = vmatmul.mubr.f32.gmra.mxu0 %v721
        %v792 = vpop.f32.mrf.mxu0
        %v793 = vadd.f32 0.0, %v792
        %v794 = vpop.f32.mrf.mxu0
        %795 = vmatprep.mubr.f32.mxu0 0.0
        %796 = vmatmul.mubr.f32.gmra.mxu0 %v724
        %v797 = vpop.f32.mrf.mxu0
        %v798 = vadd.f32 0.0, %v797
        %v799 = vpop.f32.mrf.mxu0
        %800 = vdwg.mxu0
        %s801 = scalar_lea.vmem %s2, 192
        %v802 = vld [vmem:[%s801] sm:$0xff]
        %v803 = vld [vmem:[%s801 + $0x8] sm:$0xff]
        %v804 = vld [vmem:[%s801 + $0x10] sm:$0xff]
        %v805 = vld [vmem:[%s801 + $0x18] sm:$0xff]
        %v806 = vld [vmem:[%s801 + $0x20] sm:$0xff]
        %v807 = vld [vmem:[%s801 + $0x28] sm:$0xff]
        %v808 = vld [vmem:[%s801 + $0x30] sm:$0xff]
        %v809 = vld [vmem:[%s801 + $0x38] sm:$0xff]
        %v810 = vld [vmem:[%s801 + $0x40] sm:$0xff]
        %v811 = vld [vmem:[%s801 + $0x48] sm:$0xff]
        %v812 = vld [vmem:[%s801 + $0x50] sm:$0xff]
        %v813 = vld [vmem:[%s801 + $0x58] sm:$0xff]
        %v815 = vsel %vm554, %v793, 0
        %v818 = vsel %vm554, %v798, 0
        %820 = vmatprep.subr.mxu0 0.0
        %821 = vmatpush1.msra.mxu0 0.0
        %822 = vmatprep.subr.mxu0 0.0
        %823 = vmatpush1.msra.mxu0 0.0
        %824 = vmatprep.subr.mxu0 0.0
        %825 = vmatpush1.msra.mxu0 0.0
        %826 = vmatprep.subr.mxu0 0.0
        %827 = vmatpush1.msra.mxu0 0.0
        %828 = vmatprep.subr.mxu0 0.0
        %829 = vmatpush1.msra.mxu0 %v813
        %830 = vmatprep.subr.mxu0 0.0
        %831 = vmatpush1.msra.mxu0 %v812
        %832 = vmatprep.subr.mxu0 0.0
        %833 = vmatpush1.msra.mxu0 %v811
        %834 = vmatprep.subr.mxu0 0.0
        %835 = vmatpush1.msra.mxu0 %v810
        %836 = vmatprep.subr.mxu0 0.0
        %837 = vmatpush1.msra.mxu0 %v809
        %838 = vmatprep.subr.mxu0 0.0
        %839 = vmatpush1.msra.mxu0 %v808
        %840 = vmatprep.subr.mxu0 0.0
        %841 = vmatpush1.msra.mxu0 %v807
        %842 = vmatprep.subr.mxu0 0.0
        %843 = vmatpush1.msra.mxu0 %v806
        %844 = vmatprep.subr.mxu0 0.0
        %845 = vmatpush1.msra.mxu0 %v805
        %846 = vmatprep.subr.mxu0 0.0
        %847 = vmatpush1.msra.mxu0 %v804
        %848 = vmatprep.subr.mxu0 0.0
        %849 = vmatpush1.msra.mxu0 %v803
        %850 = vmatprep.subr.mxu0 0.0
        %851 = vmatpush1.msra.mxu0 %v802
        %852 = vmatprep.subr.mxu0 0.0
        %853 = vmatpush2.msra.mxu0 0.0
        %854 = vmatprep.subr.mxu0 0.0
        %855 = vmatpush2.msra.mxu0 0.0
        %856 = vmatprep.subr.mxu0 0.0
        %857 = vmatpush2.msra.mxu0 0.0
        %858 = vmatprep.subr.mxu0 0.0
        %859 = vmatpush2.msra.mxu0 0.0
        %860 = vmatprep.subr.mxu0 0.0
        %861 = vmatpush2.msra.mxu0 0.0
        %862 = vmatprep.subr.mxu0 0.0
        %863 = vmatpush2.msra.mxu0 0.0
        %864 = vmatprep.subr.mxu0 0.0
        %865 = vmatpush2.msra.mxu0 0.0
        %866 = vmatprep.subr.mxu0 0.0
        %867 = vmatpush2.msra.mxu0 0.0
        %868 = vmatprep.subr.mxu0 0.0
        %869 = vmatpush2.msra.mxu0 0.0
        %870 = vmatprep.subr.mxu0 0.0
        %871 = vmatpush2.msra.mxu0 0.0
        %872 = vmatprep.subr.mxu0 0.0
        %873 = vmatpush2.msra.mxu0 0.0
        %874 = vmatprep.subr.mxu0 0.0
        %875 = vmatpush2.msra.mxu0 0.0
        %876 = vmatprep.subr.mxu0 0.0
        %877 = vmatpush2.msra.mxu0 0.0
        %878 = vmatprep.subr.mxu0 0.0
        %879 = vmatpush2.msra.mxu0 0.0
        %880 = vmatprep.subr.mxu0 0.0
        %881 = vmatpush2.msra.mxu0 0.0
        %882 = vmatprep.subr.mxu0 0.0
        %883 = vmatpush2.msra.mxu0 0.0
        %884 = vmatprep.mubr.f32.mxu0 0.0
        %885 = vmatmul.mubr.f32.gmra.mxu0 %v815
        %v886 = vpop.f32.mrf.mxu0
        %v887 = vadd.f32 0.0, %v886
        %v888 = vpop.f32.mrf.mxu0
        %889 = vmatprep.mubr.f32.mxu0 0.0
        %890 = vmatmul.mubr.f32.gmra.mxu0 %v818
        %v891 = vpop.f32.mrf.mxu0
        %v892 = vadd.f32 0.0, %v891
        %v893 = vpop.f32.mrf.mxu0
        %894 = vdwg.mxu0
        %v895 = vadd.f32 %v709, %v887
        %v896 = vadd.f32 %v714, %v892
        %v897 = vld [vmem:[%s3] sm:$0x1]
        %v899 = vlaneseq
        %v900 = vshrl.u32 %v899, 7
        %v901 = vsub.s32 0, %v900
        %v902 = vrot.slane %v897, %v901
        %v904 = vadd.f32 %v895, %v902
        %v905 = vadd.f32 %v896, %v902
        %v906 = vmax.f32 %v904, 0.0
        %v907 = vmax.f32 %v905, 0.0
        %v908 = vld [vmem:[%s4] sm:$0x7f]
        %vm909 = vcmask 130048
        %v911 = vsel %vm909, %v908, 0
        %913 = vmatprep.subr.mxu0 0.0
        %914 = vmatpush1.msra.mxu0 0.0
        %915 = vmatprep.subr.mxu0 0.0
        %916 = vmatpush1.msra.mxu0 0.0
        %917 = vmatprep.subr.mxu0 0.0
        %918 = vmatpush1.msra.mxu0 0.0
        %919 = vmatprep.subr.mxu0 0.0
        %920 = vmatpush1.msra.mxu0 0.0
        %921 = vmatprep.subr.mxu0 0.0
        %922 = vmatpush1.msra.mxu0 0.0
        %923 = vmatprep.subr.mxu0 0.0
        %924 = vmatpush1.msra.mxu0 0.0
        %925 = vmatprep.subr.mxu0 0.0
        %926 = vmatpush1.msra.mxu0 0.0
        %927 = vmatprep.subr.mxu0 0.0
        %928 = vmatpush1.msra.mxu0 0.0
        %929 = vmatprep.subr.mxu0 0.0
        %930 = vmatpush1.msra.mxu0 0.0
        %931 = vmatprep.subr.mxu0 0.0
        %932 = vmatpush1.msra.mxu0 0.0
        %933 = vmatprep.subr.mxu0 0.0
        %934 = vmatpush1.msra.mxu0 0.0
        %935 = vmatprep.subr.mxu0 0.0
        %936 = vmatpush1.msra.mxu0 0.0
        %937 = vmatprep.subr.mxu0 0.0
        %938 = vmatpush1.msra.mxu0 0.0
        %939 = vmatprep.subr.mxu0 0.0
        %940 = vmatpush1.msra.mxu0 0.0
        %941 = vmatprep.subr.mxu0 0.0
        %942 = vmatpush1.msra.mxu0 %v907
        %943 = vmatprep.subr.mxu0 0.0
        %944 = vmatpush1.msra.mxu0 %v906
        %945 = vmatprep.subr.mxu0 0.0
        %946 = vmatpush2.msra.mxu0 0.0
        %947 = vmatprep.subr.mxu0 0.0
        %948 = vmatpush2.msra.mxu0 0.0
        %949 = vmatprep.subr.mxu0 0.0
        %950 = vmatpush2.msra.mxu0 0.0
        %951 = vmatprep.subr.mxu0 0.0
        %952 = vmatpush2.msra.mxu0 0.0
        %953 = vmatprep.subr.mxu0 0.0
        %954 = vmatpush2.msra.mxu0 0.0
        %955 = vmatprep.subr.mxu0 0.0
        %956 = vmatpush2.msra.mxu0 0.0
        %957 = vmatprep.subr.mxu0 0.0
        %958 = vmatpush2.msra.mxu0 0.0
        %959 = vmatprep.subr.mxu0 0.0
        %960 = vmatpush2.msra.mxu0 0.0
        %961 = vmatprep.subr.mxu0 0.0
        %962 = vmatpush2.msra.mxu0 0.0
        %963 = vmatprep.subr.mxu0 0.0
        %964 = vmatpush2.msra.mxu0 0.0
        %965 = vmatprep.subr.mxu0 0.0
        %966 = vmatpush2.msra.mxu0 0.0
        %967 = vmatprep.subr.mxu0 0.0
        %968 = vmatpush2.msra.mxu0 0.0
        %969 = vmatprep.subr.mxu0 0.0
        %970 = vmatpush2.msra.mxu0 0.0
        %971 = vmatprep.subr.mxu0 0.0
        %972 = vmatpush2.msra.mxu0 0.0
        %973 = vmatprep.subr.mxu0 0.0
        %974 = vmatpush2.msra.mxu0 0.0
        %975 = vmatprep.subr.mxu0 0.0
        %976 = vmatpush2.msra.mxu0 0.0
        %977 = vmatprep.mubr.f32.mxu0 0.0
        %978 = vmatmul.mubr.f32.gmra.mxu0 %v911
        %v979 = vpop.f32.mrf.mxu0
        %v980 = vadd.f32 0.0, %v979
        %v981 = vpop.f32.mrf.mxu0
        %982 = vdwg.mxu0
        %v983 = vld [vmem:[%s5] sm:$0xff]
        %v984 = vld [vmem:[%s5 + $0x8] sm:$0xff]
        %v985 = vld [vmem:[%s5 + $0x10] sm:$0xff]
        %v986 = vld [vmem:[%s5 + $0x18] sm:$0xff]
        %v987 = vld [vmem:[%s5 + $0x20] sm:$0xff]
        %v988 = vld [vmem:[%s5 + $0x28] sm:$0xff]
        %v989 = vld [vmem:[%s5 + $0x30] sm:$0xff]
        %v990 = vld [vmem:[%s5 + $0x38] sm:$0xff]
        %v991 = vld [vmem:[%s5 + $0x40] sm:$0xff]
        %v992 = vld [vmem:[%s5 + $0x48] sm:$0xff]
        %v993 = vld [vmem:[%s5 + $0x50] sm:$0xff]
        %v994 = vld [vmem:[%s5 + $0x58] sm:$0xff]
        %v996 = vsel %vm554, %v980, 0
        %998 = vmatprep.subr.mxu0 0.0
        %999 = vmatpush1.msra.mxu0 0.0
        %1000 = vmatprep.subr.mxu0 0.0
        %1001 = vmatpush1.msra.mxu0 0.0
        %1002 = vmatprep.subr.mxu0 0.0
        %1003 = vmatpush1.msra.mxu0 0.0
        %1004 = vmatprep.subr.mxu0 0.0
        %1005 = vmatpush1.msra.mxu0 0.0
        %1006 = vmatprep.subr.mxu0 0.0
        %1007 = vmatpush1.msra.mxu0 %v994
        %1008 = vmatprep.subr.mxu0 0.0
        %1009 = vmatpush1.msra.mxu0 %v993
        %1010 = vmatprep.subr.mxu0 0.0
        %1011 = vmatpush1.msra.mxu0 %v992
        %1012 = vmatprep.subr.mxu0 0.0
        %1013 = vmatpush1.msra.mxu0 %v991
        %1014 = vmatprep.subr.mxu0 0.0
        %1015 = vmatpush1.msra.mxu0 %v990
        %1016 = vmatprep.subr.mxu0 0.0
        %1017 = vmatpush1.msra.mxu0 %v989
        %1018 = vmatprep.subr.mxu0 0.0
        %1019 = vmatpush1.msra.mxu0 %v988
        %1020 = vmatprep.subr.mxu0 0.0
        %1021 = vmatpush1.msra.mxu0 %v987
        %1022 = vmatprep.subr.mxu0 0.0
        %1023 = vmatpush1.msra.mxu0 %v986
        %1024 = vmatprep.subr.mxu0 0.0
        %1025 = vmatpush1.msra.mxu0 %v985
        %1026 = vmatprep.subr.mxu0 0.0
        %1027 = vmatpush1.msra.mxu0 %v984
        %1028 = vmatprep.subr.mxu0 0.0
        %1029 = vmatpush1.msra.mxu0 %v983
        %1030 = vmatprep.subr.mxu0 0.0
        %1031 = vmatpush2.msra.mxu0 0.0
        %1032 = vmatprep.subr.mxu0 0.0
        %1033 = vmatpush2.msra.mxu0 0.0
        %1034 = vmatprep.subr.mxu0 0.0
        %1035 = vmatpush2.msra.mxu0 0.0
        %1036 = vmatprep.subr.mxu0 0.0
        %1037 = vmatpush2.msra.mxu0 0.0
        %1038 = vmatprep.subr.mxu0 0.0
        %1039 = vmatpush2.msra.mxu0 0.0
        %1040 = vmatprep.subr.mxu0 0.0
        %1041 = vmatpush2.msra.mxu0 0.0
        %1042 = vmatprep.subr.mxu0 0.0
        %1043 = vmatpush2.msra.mxu0 0.0
        %1044 = vmatprep.subr.mxu0 0.0
        %1045 = vmatpush2.msra.mxu0 0.0
        %1046 = vmatprep.subr.mxu0 0.0
        %1047 = vmatpush2.msra.mxu0 0.0
        %1048 = vmatprep.subr.mxu0 0.0
        %1049 = vmatpush2.msra.mxu0 0.0
        %1050 = vmatprep.subr.mxu0 0.0
        %1051 = vmatpush2.msra.mxu0 0.0
        %1052 = vmatprep.subr.mxu0 0.0
        %1053 = vmatpush2.msra.mxu0 0.0
        %1054 = vmatprep.subr.mxu0 0.0
        %1055 = vmatpush2.msra.mxu0 0.0
        %1056 = vmatprep.subr.mxu0 0.0
        %1057 = vmatpush2.msra.mxu0 0.0
        %1058 = vmatprep.subr.mxu0 0.0
        %1059 = vmatpush2.msra.mxu0 0.0
        %1060 = vmatprep.subr.mxu0 0.0
        %1061 = vmatpush2.msra.mxu0 0.0
        %1062 = vmatprep.mubr.f32.mxu0 0.0
        %1063 = vmatmul.mubr.f32.gmra.mxu0 %v996
        %v1064 = vpop.f32.mrf.mxu0
        %v1065 = vadd.f32 0.0, %v1064
        %v1066 = vpop.f32.mrf.mxu0
        %1067 = vdwg.mxu0
        %s1068 = scalar_lea.vmem %s5, 96
        %v1069 = vld [vmem:[%s1068] sm:$0xff]
        %v1070 = vld [vmem:[%s1068 + $0x8] sm:$0xff]
        %v1071 = vld [vmem:[%s1068 + $0x10] sm:$0xff]
        %v1072 = vld [vmem:[%s1068 + $0x18] sm:$0xff]
        %v1073 = vld [vmem:[%s1068 + $0x20] sm:$0xff]
        %v1074 = vld [vmem:[%s1068 + $0x28] sm:$0xff]
        %v1075 = vld [vmem:[%s1068 + $0x30] sm:$0xff]
        %v1076 = vld [vmem:[%s1068 + $0x38] sm:$0xff]
        %v1077 = vld [vmem:[%s1068 + $0x40] sm:$0xff]
        %v1078 = vld [vmem:[%s1068 + $0x48] sm:$0xff]
        %v1079 = vld [vmem:[%s1068 + $0x50] sm:$0xff]
        %v1080 = vld [vmem:[%s1068 + $0x58] sm:$0xff]
        %1081 = vmatprep.subr.mxu0 0.0
        %1082 = vmatpush1.msra.mxu0 0.0
        %1083 = vmatprep.subr.mxu0 0.0
        %1084 = vmatpush1.msra.mxu0 0.0
        %1085 = vmatprep.subr.mxu0 0.0
        %1086 = vmatpush1.msra.mxu0 0.0
        %1087 = vmatprep.subr.mxu0 0.0
        %1088 = vmatpush1.msra.mxu0 0.0
        %1089 = vmatprep.subr.mxu0 0.0
        %1090 = vmatpush1.msra.mxu0 %v1080
        %1091 = vmatprep.subr.mxu0 0.0
        %1092 = vmatpush1.msra.mxu0 %v1079
        %1093 = vmatprep.subr.mxu0 0.0
        %1094 = vmatpush1.msra.mxu0 %v1078
        %1095 = vmatprep.subr.mxu0 0.0
        %1096 = vmatpush1.msra.mxu0 %v1077
        %1097 = vmatprep.subr.mxu0 0.0
        %1098 = vmatpush1.msra.mxu0 %v1076
        %1099 = vmatprep.subr.mxu0 0.0
        %1100 = vmatpush1.msra.mxu0 %v1075
        %1101 = vmatprep.subr.mxu0 0.0
        %1102 = vmatpush1.msra.mxu0 %v1074
        %1103 = vmatprep.subr.mxu0 0.0
        %1104 = vmatpush1.msra.mxu0 %v1073
        %1105 = vmatprep.subr.mxu0 0.0
        %1106 = vmatpush1.msra.mxu0 %v1072
        %1107 = vmatprep.subr.mxu0 0.0
        %1108 = vmatpush1.msra.mxu0 %v1071
        %1109 = vmatprep.subr.mxu0 0.0
        %1110 = vmatpush1.msra.mxu0 %v1070
        %1111 = vmatprep.subr.mxu0 0.0
        %1112 = vmatpush1.msra.mxu0 %v1069
        %1113 = vmatprep.subr.mxu0 0.0
        %1114 = vmatpush2.msra.mxu0 0.0
        %1115 = vmatprep.subr.mxu0 0.0
        %1116 = vmatpush2.msra.mxu0 0.0
        %1117 = vmatprep.subr.mxu0 0.0
        %1118 = vmatpush2.msra.mxu0 0.0
        %1119 = vmatprep.subr.mxu0 0.0
        %1120 = vmatpush2.msra.mxu0 0.0
        %1121 = vmatprep.subr.mxu0 0.0
        %1122 = vmatpush2.msra.mxu0 0.0
        %1123 = vmatprep.subr.mxu0 0.0
        %1124 = vmatpush2.msra.mxu0 0.0
        %1125 = vmatprep.subr.mxu0 0.0
        %1126 = vmatpush2.msra.mxu0 0.0
        %1127 = vmatprep.subr.mxu0 0.0
        %1128 = vmatpush2.msra.mxu0 0.0
        %1129 = vmatprep.subr.mxu0 0.0
        %1130 = vmatpush2.msra.mxu0 0.0
        %1131 = vmatprep.subr.mxu0 0.0
        %1132 = vmatpush2.msra.mxu0 0.0
        %1133 = vmatprep.subr.mxu0 0.0
        %1134 = vmatpush2.msra.mxu0 0.0
        %1135 = vmatprep.subr.mxu0 0.0
        %1136 = vmatpush2.msra.mxu0 0.0
        %1137 = vmatprep.subr.mxu0 0.0
        %1138 = vmatpush2.msra.mxu0 0.0
        %1139 = vmatprep.subr.mxu0 0.0
        %1140 = vmatpush2.msra.mxu0 0.0
        %1141 = vmatprep.subr.mxu0 0.0
        %1142 = vmatpush2.msra.mxu0 0.0
        %1143 = vmatprep.subr.mxu0 0.0
        %1144 = vmatpush2.msra.mxu0 0.0
        %1145 = vmatprep.mubr.f32.mxu0 0.0
        %1146 = vmatmul.mubr.f32.gmra.mxu0 %v996
        %v1147 = vpop.f32.mrf.mxu0
        %v1148 = vadd.f32 0.0, %v1147
        %v1149 = vpop.f32.mrf.mxu0
        %1150 = vdwg.mxu0
        %v1151 = vmax.f32 %v1065, %v1148
        %s1152 = scalar_lea.vmem %s5, 192
        %v1153 = vld [vmem:[%s1152] sm:$0xff]
        %v1154 = vld [vmem:[%s1152 + $0x8] sm:$0xff]
        %v1155 = vld [vmem:[%s1152 + $0x10] sm:$0xff]
        %v1156 = vld [vmem:[%s1152 + $0x18] sm:$0xff]
        %v1157 = vld [vmem:[%s1152 + $0x20] sm:$0xff]
        %v1158 = vld [vmem:[%s1152 + $0x28] sm:$0xff]
        %v1159 = vld [vmem:[%s1152 + $0x30] sm:$0xff]
        %v1160 = vld [vmem:[%s1152 + $0x38] sm:$0xff]
        %v1161 = vld [vmem:[%s1152 + $0x40] sm:$0xff]
        %v1162 = vld [vmem:[%s1152 + $0x48] sm:$0xff]
        %v1163 = vld [vmem:[%s1152 + $0x50] sm:$0xff]
        %v1164 = vld [vmem:[%s1152 + $0x58] sm:$0xff]
        %1165 = vmatprep.subr.mxu0 0.0
        %1166 = vmatpush1.msra.mxu0 0.0
        %1167 = vmatprep.subr.mxu0 0.0
        %1168 = vmatpush1.msra.mxu0 0.0
        %1169 = vmatprep.subr.mxu0 0.0
        %1170 = vmatpush1.msra.mxu0 0.0
        %1171 = vmatprep.subr.mxu0 0.0
        %1172 = vmatpush1.msra.mxu0 0.0
        %1173 = vmatprep.subr.mxu0 0.0
        %1174 = vmatpush1.msra.mxu0 %v1164
        %1175 = vmatprep.subr.mxu0 0.0
        %1176 = vmatpush1.msra.mxu0 %v1163
        %1177 = vmatprep.subr.mxu0 0.0
        %1178 = vmatpush1.msra.mxu0 %v1162
        %1179 = vmatprep.subr.mxu0 0.0
        %1180 = vmatpush1.msra.mxu0 %v1161
        %1181 = vmatprep.subr.mxu0 0.0
        %1182 = vmatpush1.msra.mxu0 %v1160
        %1183 = vmatprep.subr.mxu0 0.0
        %1184 = vmatpush1.msra.mxu0 %v1159
        %1185 = vmatprep.subr.mxu0 0.0
        %1186 = vmatpush1.msra.mxu0 %v1158
        %1187 = vmatprep.subr.mxu0 0.0
        %1188 = vmatpush1.msra.mxu0 %v1157
        %1189 = vmatprep.subr.mxu0 0.0
        %1190 = vmatpush1.msra.mxu0 %v1156
        %1191 = vmatprep.subr.mxu0 0.0
        %1192 = vmatpush1.msra.mxu0 %v1155
        %1193 = vmatprep.subr.mxu0 0.0
        %1194 = vmatpush1.msra.mxu0 %v1154
        %1195 = vmatprep.subr.mxu0 0.0
        %1196 = vmatpush1.msra.mxu0 %v1153
        %1197 = vmatprep.subr.mxu0 0.0
        %1198 = vmatpush2.msra.mxu0 0.0
        %1199 = vmatprep.subr.mxu0 0.0
        %1200 = vmatpush2.msra.mxu0 0.0
        %1201 = vmatprep.subr.mxu0 0.0
        %1202 = vmatpush2.msra.mxu0 0.0
        %1203 = vmatprep.subr.mxu0 0.0
        %1204 = vmatpush2.msra.mxu0 0.0
        %1205 = vmatprep.subr.mxu0 0.0
        %1206 = vmatpush2.msra.mxu0 0.0
        %1207 = vmatprep.subr.mxu0 0.0
        %1208 = vmatpush2.msra.mxu0 0.0
        %1209 = vmatprep.subr.mxu0 0.0
        %1210 = vmatpush2.msra.mxu0 0.0
        %1211 = vmatprep.subr.mxu0 0.0
        %1212 = vmatpush2.msra.mxu0 0.0
        %1213 = vmatprep.subr.mxu0 0.0
        %1214 = vmatpush2.msra.mxu0 0.0
        %1215 = vmatprep.subr.mxu0 0.0
        %1216 = vmatpush2.msra.mxu0 0.0
        %1217 = vmatprep.subr.mxu0 0.0
        %1218 = vmatpush2.msra.mxu0 0.0
        %1219 = vmatprep.subr.mxu0 0.0
        %1220 = vmatpush2.msra.mxu0 0.0
        %1221 = vmatprep.subr.mxu0 0.0
        %1222 = vmatpush2.msra.mxu0 0.0
        %1223 = vmatprep.subr.mxu0 0.0
        %1224 = vmatpush2.msra.mxu0 0.0
        %1225 = vmatprep.subr.mxu0 0.0
        %1226 = vmatpush2.msra.mxu0 0.0
        %1227 = vmatprep.subr.mxu0 0.0
        %1228 = vmatpush2.msra.mxu0 0.0
        %1229 = vmatprep.mubr.f32.mxu0 0.0
        %1230 = vmatmul.mubr.f32.gmra.mxu0 %v996
        %v1231 = vpop.f32.mrf.mxu0
        %v1232 = vadd.f32 0.0, %v1231
        %v1233 = vpop.f32.mrf.mxu0
        %1234 = vdwg.mxu0
        %v1235 = vmax.f32 %v1151, %v1232
        %s1236 = scalar_lea.vmem %s4, 8
        %v1237 = vld [vmem:[%s1236] sm:$0x7f]
        %v1239 = vsel %vm909, %v1237, 0
        %1241 = vmatprep.subr.mxu0 0.0
        %1242 = vmatpush1.msra.mxu0 0.0
        %1243 = vmatprep.subr.mxu0 0.0
        %1244 = vmatpush1.msra.mxu0 0.0
        %1245 = vmatprep.subr.mxu0 0.0
        %1246 = vmatpush1.msra.mxu0 0.0
        %1247 = vmatprep.subr.mxu0 0.0
        %1248 = vmatpush1.msra.mxu0 0.0
        %1249 = vmatprep.subr.mxu0 0.0
        %1250 = vmatpush1.msra.mxu0 0.0
        %1251 = vmatprep.subr.mxu0 0.0
        %1252 = vmatpush1.msra.mxu0 0.0
        %1253 = vmatprep.subr.mxu0 0.0
        %1254 = vmatpush1.msra.mxu0 0.0
        %1255 = vmatprep.subr.mxu0 0.0
        %1256 = vmatpush1.msra.mxu0 0.0
        %1257 = vmatprep.subr.mxu0 0.0
        %1258 = vmatpush1.msra.mxu0 0.0
        %1259 = vmatprep.subr.mxu0 0.0
        %1260 = vmatpush1.msra.mxu0 0.0
        %1261 = vmatprep.subr.mxu0 0.0
        %1262 = vmatpush1.msra.mxu0 0.0
        %1263 = vmatprep.subr.mxu0 0.0
        %1264 = vmatpush1.msra.mxu0 0.0
        %1265 = vmatprep.subr.mxu0 0.0
        %1266 = vmatpush1.msra.mxu0 0.0
        %1267 = vmatprep.subr.mxu0 0.0
        %1268 = vmatpush1.msra.mxu0 0.0
        %1269 = vmatprep.subr.mxu0 0.0
        %1270 = vmatpush1.msra.mxu0 %v907
        %1271 = vmatprep.subr.mxu0 0.0
        %1272 = vmatpush1.msra.mxu0 %v906
        %1273 = vmatprep.subr.mxu0 0.0
        %1274 = vmatpush2.msra.mxu0 0.0
        %1275 = vmatprep.subr.mxu0 0.0
        %1276 = vmatpush2.msra.mxu0 0.0
        %1277 = vmatprep.subr.mxu0 0.0
        %1278 = vmatpush2.msra.mxu0 0.0
        %1279 = vmatprep.subr.mxu0 0.0
        %1280 = vmatpush2.msra.mxu0 0.0
        %1281 = vmatprep.subr.mxu0 0.0
        %1282 = vmatpush2.msra.mxu0 0.0
        %1283 = vmatprep.subr.mxu0 0.0
        %1284 = vmatpush2.msra.mxu0 0.0
        %1285 = vmatprep.subr.mxu0 0.0
        %1286 = vmatpush2.msra.mxu0 0.0
        %1287 = vmatprep.subr.mxu0 0.0
        %1288 = vmatpush2.msra.mxu0 0.0
        %1289 = vmatprep.subr.mxu0 0.0
        %1290 = vmatpush2.msra.mxu0 0.0
        %1291 = vmatprep.subr.mxu0 0.0
        %1292 = vmatpush2.msra.mxu0 0.0
        %1293 = vmatprep.subr.mxu0 0.0
        %1294 = vmatpush2.msra.mxu0 0.0
        %1295 = vmatprep.subr.mxu0 0.0
        %1296 = vmatpush2.msra.mxu0 0.0
        %1297 = vmatprep.subr.mxu0 0.0
        %1298 = vmatpush2.msra.mxu0 0.0
        %1299 = vmatprep.subr.mxu0 0.0
        %1300 = vmatpush2.msra.mxu0 0.0
        %1301 = vmatprep.subr.mxu0 0.0
        %1302 = vmatpush2.msra.mxu0 0.0
        %1303 = vmatprep.subr.mxu0 0.0
        %1304 = vmatpush2.msra.mxu0 0.0
        %1305 = vmatprep.mubr.f32.mxu0 0.0
        %1306 = vmatmul.mubr.f32.gmra.mxu0 %v1239
        %v1307 = vpop.f32.mrf.mxu0
        %v1308 = vadd.f32 0.0, %v1307
        %v1309 = vpop.f32.mrf.mxu0
        %1310 = vdwg.mxu0
        %v1312 = vsel %vm554, %v1308, 0
        %1314 = vmatprep.subr.mxu0 0.0
        %1315 = vmatpush1.msra.mxu0 0.0
        %1316 = vmatprep.subr.mxu0 0.0
        %1317 = vmatpush1.msra.mxu0 0.0
        %1318 = vmatprep.subr.mxu0 0.0
        %1319 = vmatpush1.msra.mxu0 0.0
        %1320 = vmatprep.subr.mxu0 0.0
        %1321 = vmatpush1.msra.mxu0 0.0
        %1322 = vmatprep.subr.mxu0 0.0
        %1323 = vmatpush1.msra.mxu0 %v994
        %1324 = vmatprep.subr.mxu0 0.0
        %1325 = vmatpush1.msra.mxu0 %v993
        %1326 = vmatprep.subr.mxu0 0.0
        %1327 = vmatpush1.msra.mxu0 %v992
        %1328 = vmatprep.subr.mxu0 0.0
        %1329 = vmatpush1.msra.mxu0 %v991
        %1330 = vmatprep.subr.mxu0 0.0
        %1331 = vmatpush1.msra.mxu0 %v990
        %1332 = vmatprep.subr.mxu0 0.0
        %1333 = vmatpush1.msra.mxu0 %v989
        %1334 = vmatprep.subr.mxu0 0.0
        %1335 = vmatpush1.msra.mxu0 %v988
        %1336 = vmatprep.subr.mxu0 0.0
        %1337 = vmatpush1.msra.mxu0 %v987
        %1338 = vmatprep.subr.mxu0 0.0
        %1339 = vmatpush1.msra.mxu0 %v986
        %1340 = vmatprep.subr.mxu0 0.0
        %1341 = vmatpush1.msra.mxu0 %v985
        %1342 = vmatprep.subr.mxu0 0.0
        %1343 = vmatpush1.msra.mxu0 %v984
        %1344 = vmatprep.subr.mxu0 0.0
        %1345 = vmatpush1.msra.mxu0 %v983
        %1346 = vmatprep.subr.mxu0 0.0
        %1347 = vmatpush2.msra.mxu0 0.0
        %1348 = vmatprep.subr.mxu0 0.0
        %1349 = vmatpush2.msra.mxu0 0.0
        %1350 = vmatprep.subr.mxu0 0.0
        %1351 = vmatpush2.msra.mxu0 0.0
        %1352 = vmatprep.subr.mxu0 0.0
        %1353 = vmatpush2.msra.mxu0 0.0
        %1354 = vmatprep.subr.mxu0 0.0
        %1355 = vmatpush2.msra.mxu0 0.0
        %1356 = vmatprep.subr.mxu0 0.0
        %1357 = vmatpush2.msra.mxu0 0.0
        %1358 = vmatprep.subr.mxu0 0.0
        %1359 = vmatpush2.msra.mxu0 0.0
        %1360 = vmatprep.subr.mxu0 0.0
        %1361 = vmatpush2.msra.mxu0 0.0
        %1362 = vmatprep.subr.mxu0 0.0
        %1363 = vmatpush2.msra.mxu0 0.0
        %1364 = vmatprep.subr.mxu0 0.0
        %1365 = vmatpush2.msra.mxu0 0.0
        %1366 = vmatprep.subr.mxu0 0.0
        %1367 = vmatpush2.msra.mxu0 0.0
        %1368 = vmatprep.subr.mxu0 0.0
        %1369 = vmatpush2.msra.mxu0 0.0
        %1370 = vmatprep.subr.mxu0 0.0
        %1371 = vmatpush2.msra.mxu0 0.0
        %1372 = vmatprep.subr.mxu0 0.0
        %1373 = vmatpush2.msra.mxu0 0.0
        %1374 = vmatprep.subr.mxu0 0.0
        %1375 = vmatpush2.msra.mxu0 0.0
        %1376 = vmatprep.subr.mxu0 0.0
        %1377 = vmatpush2.msra.mxu0 0.0
        %1378 = vmatprep.mubr.f32.mxu0 0.0
        %1379 = vmatmul.mubr.f32.gmra.mxu0 %v1312
        %v1380 = vpop.f32.mrf.mxu0
        %v1381 = vadd.f32 0.0, %v1380
        %v1382 = vpop.f32.mrf.mxu0
        %1383 = vdwg.mxu0
        %v1384 = vmax.f32 %v1235, %v1381
        %1385 = vmatprep.subr.mxu0 0.0
        %1386 = vmatpush1.msra.mxu0 0.0
        %1387 = vmatprep.subr.mxu0 0.0
        %1388 = vmatpush1.msra.mxu0 0.0
        %1389 = vmatprep.subr.mxu0 0.0
        %1390 = vmatpush1.msra.mxu0 0.0
        %1391 = vmatprep.subr.mxu0 0.0
        %1392 = vmatpush1.msra.mxu0 0.0
        %1393 = vmatprep.subr.mxu0 0.0
        %1394 = vmatpush1.msra.mxu0 %v1080
        %1395 = vmatprep.subr.mxu0 0.0
        %1396 = vmatpush1.msra.mxu0 %v1079
        %1397 = vmatprep.subr.mxu0 0.0
        %1398 = vmatpush1.msra.mxu0 %v1078
        %1399 = vmatprep.subr.mxu0 0.0
        %1400 = vmatpush1.msra.mxu0 %v1077
        %1401 = vmatprep.subr.mxu0 0.0
        %1402 = vmatpush1.msra.mxu0 %v1076
        %1403 = vmatprep.subr.mxu0 0.0
        %1404 = vmatpush1.msra.mxu0 %v1075
        %1405 = vmatprep.subr.mxu0 0.0
        %1406 = vmatpush1.msra.mxu0 %v1074
        %1407 = vmatprep.subr.mxu0 0.0
        %1408 = vmatpush1.msra.mxu0 %v1073
        %1409 = vmatprep.subr.mxu0 0.0
        %1410 = vmatpush1.msra.mxu0 %v1072
        %1411 = vmatprep.subr.mxu0 0.0
        %1412 = vmatpush1.msra.mxu0 %v1071
        %1413 = vmatprep.subr.mxu0 0.0
        %1414 = vmatpush1.msra.mxu0 %v1070
        %1415 = vmatprep.subr.mxu0 0.0
        %1416 = vmatpush1.msra.mxu0 %v1069
        %1417 = vmatprep.subr.mxu0 0.0
        %1418 = vmatpush2.msra.mxu0 0.0
        %1419 = vmatprep.subr.mxu0 0.0
        %1420 = vmatpush2.msra.mxu0 0.0
        %1421 = vmatprep.subr.mxu0 0.0
        %1422 = vmatpush2.msra.mxu0 0.0
        %1423 = vmatprep.subr.mxu0 0.0
        %1424 = vmatpush2.msra.mxu0 0.0
        %1425 = vmatprep.subr.mxu0 0.0
        %1426 = vmatpush2.msra.mxu0 0.0
        %1427 = vmatprep.subr.mxu0 0.0
        %1428 = vmatpush2.msra.mxu0 0.0
        %1429 = vmatprep.subr.mxu0 0.0
        %1430 = vmatpush2.msra.mxu0 0.0
        %1431 = vmatprep.subr.mxu0 0.0
        %1432 = vmatpush2.msra.mxu0 0.0
        %1433 = vmatprep.subr.mxu0 0.0
        %1434 = vmatpush2.msra.mxu0 0.0
        %1435 = vmatprep.subr.mxu0 0.0
        %1436 = vmatpush2.msra.mxu0 0.0
        %1437 = vmatprep.subr.mxu0 0.0
        %1438 = vmatpush2.msra.mxu0 0.0
        %1439 = vmatprep.subr.mxu0 0.0
        %1440 = vmatpush2.msra.mxu0 0.0
        %1441 = vmatprep.subr.mxu0 0.0
        %1442 = vmatpush2.msra.mxu0 0.0
        %1443 = vmatprep.subr.mxu0 0.0
        %1444 = vmatpush2.msra.mxu0 0.0
        %1445 = vmatprep.subr.mxu0 0.0
        %1446 = vmatpush2.msra.mxu0 0.0
        %1447 = vmatprep.subr.mxu0 0.0
        %1448 = vmatpush2.msra.mxu0 0.0
        %1449 = vmatprep.mubr.f32.mxu0 0.0
        %1450 = vmatmul.mubr.f32.gmra.mxu0 %v1312
        %v1451 = vpop.f32.mrf.mxu0
        %v1452 = vadd.f32 0.0, %v1451
        %v1453 = vpop.f32.mrf.mxu0
        %1454 = vdwg.mxu0
        %v1455 = vmax.f32 %v1384, %v1452
        %1456 = vmatprep.subr.mxu0 0.0
        %1457 = vmatpush1.msra.mxu0 0.0
        %1458 = vmatprep.subr.mxu0 0.0
        %1459 = vmatpush1.msra.mxu0 0.0
        %1460 = vmatprep.subr.mxu0 0.0
        %1461 = vmatpush1.msra.mxu0 0.0
        %1462 = vmatprep.subr.mxu0 0.0
        %1463 = vmatpush1.msra.mxu0 0.0
        %1464 = vmatprep.subr.mxu0 0.0
        %1465 = vmatpush1.msra.mxu0 %v1164
        %1466 = vmatprep.subr.mxu0 0.0
        %1467 = vmatpush1.msra.mxu0 %v1163
        %1468 = vmatprep.subr.mxu0 0.0
        %1469 = vmatpush1.msra.mxu0 %v1162
        %1470 = vmatprep.subr.mxu0 0.0
        %1471 = vmatpush1.msra.mxu0 %v1161
        %1472 = vmatprep.subr.mxu0 0.0
        %1473 = vmatpush1.msra.mxu0 %v1160
        %1474 = vmatprep.subr.mxu0 0.0
        %1475 = vmatpush1.msra.mxu0 %v1159
        %1476 = vmatprep.subr.mxu0 0.0
        %1477 = vmatpush1.msra.mxu0 %v1158
        %1478 = vmatprep.subr.mxu0 0.0
        %1479 = vmatpush1.msra.mxu0 %v1157
        %1480 = vmatprep.subr.mxu0 0.0
        %1481 = vmatpush1.msra.mxu0 %v1156
        %1482 = vmatprep.subr.mxu0 0.0
        %1483 = vmatpush1.msra.mxu0 %v1155
        %1484 = vmatprep.subr.mxu0 0.0
        %1485 = vmatpush1.msra.mxu0 %v1154
        %1486 = vmatprep.subr.mxu0 0.0
        %1487 = vmatpush1.msra.mxu0 %v1153
        %1488 = vmatprep.subr.mxu0 0.0
        %1489 = vmatpush2.msra.mxu0 0.0
        %1490 = vmatprep.subr.mxu0 0.0
        %1491 = vmatpush2.msra.mxu0 0.0
        %1492 = vmatprep.subr.mxu0 0.0
        %1493 = vmatpush2.msra.mxu0 0.0
        %1494 = vmatprep.subr.mxu0 0.0
        %1495 = vmatpush2.msra.mxu0 0.0
        %1496 = vmatprep.subr.mxu0 0.0
        %1497 = vmatpush2.msra.mxu0 0.0
        %1498 = vmatprep.subr.mxu0 0.0
        %1499 = vmatpush2.msra.mxu0 0.0
        %1500 = vmatprep.subr.mxu0 0.0
        %1501 = vmatpush2.msra.mxu0 0.0
        %1502 = vmatprep.subr.mxu0 0.0
        %1503 = vmatpush2.msra.mxu0 0.0
        %1504 = vmatprep.subr.mxu0 0.0
        %1505 = vmatpush2.msra.mxu0 0.0
        %1506 = vmatprep.subr.mxu0 0.0
        %1507 = vmatpush2.msra.mxu0 0.0
        %1508 = vmatprep.subr.mxu0 0.0
        %1509 = vmatpush2.msra.mxu0 0.0
        %1510 = vmatprep.subr.mxu0 0.0
        %1511 = vmatpush2.msra.mxu0 0.0
        %1512 = vmatprep.subr.mxu0 0.0
        %1513 = vmatpush2.msra.mxu0 0.0
        %1514 = vmatprep.subr.mxu0 0.0
        %1515 = vmatpush2.msra.mxu0 0.0
        %1516 = vmatprep.subr.mxu0 0.0
        %1517 = vmatpush2.msra.mxu0 0.0
        %1518 = vmatprep.subr.mxu0 0.0
        %1519 = vmatpush2.msra.mxu0 0.0
        %1520 = vmatprep.mubr.f32.mxu0 0.0
        %1521 = vmatmul.mubr.f32.gmra.mxu0 %v1312
        %v1522 = vpop.f32.mrf.mxu0
        %v1523 = vadd.f32 0.0, %v1522
        %v1524 = vpop.f32.mrf.mxu0
        %1525 = vdwg.mxu0
        %v1526 = vmax.f32 %v1455, %v1523
        %s1527 = scalar_lea.vmem %s4, 16
        %v1528 = vld [vmem:[%s1527] sm:$0x7f]
        %v1530 = vsel %vm909, %v1528, 0
        %1532 = vmatprep.subr.mxu0 0.0
        %1533 = vmatpush1.msra.mxu0 0.0
        %1534 = vmatprep.subr.mxu0 0.0
        %1535 = vmatpush1.msra.mxu0 0.0
        %1536 = vmatprep.subr.mxu0 0.0
        %1537 = vmatpush1.msra.mxu0 0.0
        %1538 = vmatprep.subr.mxu0 0.0
        %1539 = vmatpush1.msra.mxu0 0.0
        %1540 = vmatprep.subr.mxu0 0.0
        %1541 = vmatpush1.msra.mxu0 0.0
        %1542 = vmatprep.subr.mxu0 0.0
        %1543 = vmatpush1.msra.mxu0 0.0
        %1544 = vmatprep.subr.mxu0 0.0
        %1545 = vmatpush1.msra.mxu0 0.0
        %1546 = vmatprep.subr.mxu0 0.0
        %1547 = vmatpush1.msra.mxu0 0.0
        %1548 = vmatprep.subr.mxu0 0.0
        %1549 = vmatpush1.msra.mxu0 0.0
        %1550 = vmatprep.subr.mxu0 0.0
        %1551 = vmatpush1.msra.mxu0 0.0
        %1552 = vmatprep.subr.mxu0 0.0
        %1553 = vmatpush1.msra.mxu0 0.0
        %1554 = vmatprep.subr.mxu0 0.0
        %1555 = vmatpush1.msra.mxu0 0.0
        %1556 = vmatprep.subr.mxu0 0.0
        %1557 = vmatpush1.msra.mxu0 0.0
        %1558 = vmatprep.subr.mxu0 0.0
        %1559 = vmatpush1.msra.mxu0 0.0
        %1560 = vmatprep.subr.mxu0 0.0
        %1561 = vmatpush1.msra.mxu0 %v907
        %1562 = vmatprep.subr.mxu0 0.0
        %1563 = vmatpush1.msra.mxu0 %v906
        %1564 = vmatprep.subr.mxu0 0.0
        %1565 = vmatpush2.msra.mxu0 0.0
        %1566 = vmatprep.subr.mxu0 0.0
        %1567 = vmatpush2.msra.mxu0 0.0
        %1568 = vmatprep.subr.mxu0 0.0
        %1569 = vmatpush2.msra.mxu0 0.0
        %1570 = vmatprep.subr.mxu0 0.0
        %1571 = vmatpush2.msra.mxu0 0.0
        %1572 = vmatprep.subr.mxu0 0.0
        %1573 = vmatpush2.msra.mxu0 0.0
        %1574 = vmatprep.subr.mxu0 0.0
        %1575 = vmatpush2.msra.mxu0 0.0
        %1576 = vmatprep.subr.mxu0 0.0
        %1577 = vmatpush2.msra.mxu0 0.0
        %1578 = vmatprep.subr.mxu0 0.0
        %1579 = vmatpush2.msra.mxu0 0.0
        %1580 = vmatprep.subr.mxu0 0.0
        %1581 = vmatpush2.msra.mxu0 0.0
        %1582 = vmatprep.subr.mxu0 0.0
        %1583 = vmatpush2.msra.mxu0 0.0
        %1584 = vmatprep.subr.mxu0 0.0
        %1585 = vmatpush2.msra.mxu0 0.0
        %1586 = vmatprep.subr.mxu0 0.0
        %1587 = vmatpush2.msra.mxu0 0.0
        %1588 = vmatprep.subr.mxu0 0.0
        %1589 = vmatpush2.msra.mxu0 0.0
        %1590 = vmatprep.subr.mxu0 0.0
        %1591 = vmatpush2.msra.mxu0 0.0
        %1592 = vmatprep.subr.mxu0 0.0
        %1593 = vmatpush2.msra.mxu0 0.0
        %1594 = vmatprep.subr.mxu0 0.0
        %1595 = vmatpush2.msra.mxu0 0.0
        %1596 = vmatprep.mubr.f32.mxu0 0.0
        %1597 = vmatmul.mubr.f32.gmra.mxu0 %v1530
        %v1598 = vpop.f32.mrf.mxu0
        %v1599 = vadd.f32 0.0, %v1598
        %v1600 = vpop.f32.mrf.mxu0
        %1601 = vdwg.mxu0
        %v1603 = vsel %vm554, %v1599, 0
        %1605 = vmatprep.subr.mxu0 0.0
        %1606 = vmatpush1.msra.mxu0 0.0
        %1607 = vmatprep.subr.mxu0 0.0
        %1608 = vmatpush1.msra.mxu0 0.0
        %1609 = vmatprep.subr.mxu0 0.0
        %1610 = vmatpush1.msra.mxu0 0.0
        %1611 = vmatprep.subr.mxu0 0.0
        %1612 = vmatpush1.msra.mxu0 0.0
        %1613 = vmatprep.subr.mxu0 0.0
        %1614 = vmatpush1.msra.mxu0 %v994
        %1615 = vmatprep.subr.mxu0 0.0
        %1616 = vmatpush1.msra.mxu0 %v993
        %1617 = vmatprep.subr.mxu0 0.0
        %1618 = vmatpush1.msra.mxu0 %v992
        %1619 = vmatprep.subr.mxu0 0.0
        %1620 = vmatpush1.msra.mxu0 %v991
        %1621 = vmatprep.subr.mxu0 0.0
        %1622 = vmatpush1.msra.mxu0 %v990
        %1623 = vmatprep.subr.mxu0 0.0
        %1624 = vmatpush1.msra.mxu0 %v989
        %1625 = vmatprep.subr.mxu0 0.0
        %1626 = vmatpush1.msra.mxu0 %v988
        %1627 = vmatprep.subr.mxu0 0.0
        %1628 = vmatpush1.msra.mxu0 %v987
        %1629 = vmatprep.subr.mxu0 0.0
        %1630 = vmatpush1.msra.mxu0 %v986
        %1631 = vmatprep.subr.mxu0 0.0
        %1632 = vmatpush1.msra.mxu0 %v985
        %1633 = vmatprep.subr.mxu0 0.0
        %1634 = vmatpush1.msra.mxu0 %v984
        %1635 = vmatprep.subr.mxu0 0.0
        %1636 = vmatpush1.msra.mxu0 %v983
        %1637 = vmatprep.subr.mxu0 0.0
        %1638 = vmatpush2.msra.mxu0 0.0
        %1639 = vmatprep.subr.mxu0 0.0
        %1640 = vmatpush2.msra.mxu0 0.0
        %1641 = vmatprep.subr.mxu0 0.0
        %1642 = vmatpush2.msra.mxu0 0.0
        %1643 = vmatprep.subr.mxu0 0.0
        %1644 = vmatpush2.msra.mxu0 0.0
        %1645 = vmatprep.subr.mxu0 0.0
        %1646 = vmatpush2.msra.mxu0 0.0
        %1647 = vmatprep.subr.mxu0 0.0
        %1648 = vmatpush2.msra.mxu0 0.0
        %1649 = vmatprep.subr.mxu0 0.0
        %1650 = vmatpush2.msra.mxu0 0.0
        %1651 = vmatprep.subr.mxu0 0.0
        %1652 = vmatpush2.msra.mxu0 0.0
        %1653 = vmatprep.subr.mxu0 0.0
        %1654 = vmatpush2.msra.mxu0 0.0
        %1655 = vmatprep.subr.mxu0 0.0
        %1656 = vmatpush2.msra.mxu0 0.0
        %1657 = vmatprep.subr.mxu0 0.0
        %1658 = vmatpush2.msra.mxu0 0.0
        %1659 = vmatprep.subr.mxu0 0.0
        %1660 = vmatpush2.msra.mxu0 0.0
        %1661 = vmatprep.subr.mxu0 0.0
        %1662 = vmatpush2.msra.mxu0 0.0
        %1663 = vmatprep.subr.mxu0 0.0
        %1664 = vmatpush2.msra.mxu0 0.0
        %1665 = vmatprep.subr.mxu0 0.0
        %1666 = vmatpush2.msra.mxu0 0.0
        %1667 = vmatprep.subr.mxu0 0.0
        %1668 = vmatpush2.msra.mxu0 0.0
        %1669 = vmatprep.mubr.f32.mxu0 0.0
        %1670 = vmatmul.mubr.f32.gmra.mxu0 %v1603
        %v1671 = vpop.f32.mrf.mxu0
        %v1672 = vadd.f32 0.0, %v1671
        %v1673 = vpop.f32.mrf.mxu0
        %1674 = vdwg.mxu0
        %v1675 = vmax.f32 %v1526, %v1672
        %1676 = vmatprep.subr.mxu0 0.0
        %1677 = vmatpush1.msra.mxu0 0.0
        %1678 = vmatprep.subr.mxu0 0.0
        %1679 = vmatpush1.msra.mxu0 0.0
        %1680 = vmatprep.subr.mxu0 0.0
        %1681 = vmatpush1.msra.mxu0 0.0
        %1682 = vmatprep.subr.mxu0 0.0
        %1683 = vmatpush1.msra.mxu0 0.0
        %1684 = vmatprep.subr.mxu0 0.0
        %1685 = vmatpush1.msra.mxu0 %v1080
        %1686 = vmatprep.subr.mxu0 0.0
        %1687 = vmatpush1.msra.mxu0 %v1079
        %1688 = vmatprep.subr.mxu0 0.0
        %1689 = vmatpush1.msra.mxu0 %v1078
        %1690 = vmatprep.subr.mxu0 0.0
        %1691 = vmatpush1.msra.mxu0 %v1077
        %1692 = vmatprep.subr.mxu0 0.0
        %1693 = vmatpush1.msra.mxu0 %v1076
        %1694 = vmatprep.subr.mxu0 0.0
        %1695 = vmatpush1.msra.mxu0 %v1075
        %1696 = vmatprep.subr.mxu0 0.0
        %1697 = vmatpush1.msra.mxu0 %v1074
        %1698 = vmatprep.subr.mxu0 0.0
        %1699 = vmatpush1.msra.mxu0 %v1073
        %1700 = vmatprep.subr.mxu0 0.0
        %1701 = vmatpush1.msra.mxu0 %v1072
        %1702 = vmatprep.subr.mxu0 0.0
        %1703 = vmatpush1.msra.mxu0 %v1071
        %1704 = vmatprep.subr.mxu0 0.0
        %1705 = vmatpush1.msra.mxu0 %v1070
        %1706 = vmatprep.subr.mxu0 0.0
        %1707 = vmatpush1.msra.mxu0 %v1069
        %1708 = vmatprep.subr.mxu0 0.0
        %1709 = vmatpush2.msra.mxu0 0.0
        %1710 = vmatprep.subr.mxu0 0.0
        %1711 = vmatpush2.msra.mxu0 0.0
        %1712 = vmatprep.subr.mxu0 0.0
        %1713 = vmatpush2.msra.mxu0 0.0
        %1714 = vmatprep.subr.mxu0 0.0
        %1715 = vmatpush2.msra.mxu0 0.0
        %1716 = vmatprep.subr.mxu0 0.0
        %1717 = vmatpush2.msra.mxu0 0.0
        %1718 = vmatprep.subr.mxu0 0.0
        %1719 = vmatpush2.msra.mxu0 0.0
        %1720 = vmatprep.subr.mxu0 0.0
        %1721 = vmatpush2.msra.mxu0 0.0
        %1722 = vmatprep.subr.mxu0 0.0
        %1723 = vmatpush2.msra.mxu0 0.0
        %1724 = vmatprep.subr.mxu0 0.0
        %1725 = vmatpush2.msra.mxu0 0.0
        %1726 = vmatprep.subr.mxu0 0.0
        %1727 = vmatpush2.msra.mxu0 0.0
        %1728 = vmatprep.subr.mxu0 0.0
        %1729 = vmatpush2.msra.mxu0 0.0
        %1730 = vmatprep.subr.mxu0 0.0
        %1731 = vmatpush2.msra.mxu0 0.0
        %1732 = vmatprep.subr.mxu0 0.0
        %1733 = vmatpush2.msra.mxu0 0.0
        %1734 = vmatprep.subr.mxu0 0.0
        %1735 = vmatpush2.msra.mxu0 0.0
        %1736 = vmatprep.subr.mxu0 0.0
        %1737 = vmatpush2.msra.mxu0 0.0
        %1738 = vmatprep.subr.mxu0 0.0
        %1739 = vmatpush2.msra.mxu0 0.0
        %1740 = vmatprep.mubr.f32.mxu0 0.0
        %1741 = vmatmul.mubr.f32.gmra.mxu0 %v1603
        %v1742 = vpop.f32.mrf.mxu0
        %v1743 = vadd.f32 0.0, %v1742
        %v1744 = vpop.f32.mrf.mxu0
        %1745 = vdwg.mxu0
        %v1746 = vmax.f32 %v1675, %v1743
        %1747 = vmatprep.subr.mxu0 0.0
        %1748 = vmatpush1.msra.mxu0 0.0
        %1749 = vmatprep.subr.mxu0 0.0
        %1750 = vmatpush1.msra.mxu0 0.0
        %1751 = vmatprep.subr.mxu0 0.0
        %1752 = vmatpush1.msra.mxu0 0.0
        %1753 = vmatprep.subr.mxu0 0.0
        %1754 = vmatpush1.msra.mxu0 0.0
        %1755 = vmatprep.subr.mxu0 0.0
        %1756 = vmatpush1.msra.mxu0 %v1164
        %1757 = vmatprep.subr.mxu0 0.0
        %1758 = vmatpush1.msra.mxu0 %v1163
        %1759 = vmatprep.subr.mxu0 0.0
        %1760 = vmatpush1.msra.mxu0 %v1162
        %1761 = vmatprep.subr.mxu0 0.0
        %1762 = vmatpush1.msra.mxu0 %v1161
        %1763 = vmatprep.subr.mxu0 0.0
        %1764 = vmatpush1.msra.mxu0 %v1160
        %1765 = vmatprep.subr.mxu0 0.0
        %1766 = vmatpush1.msra.mxu0 %v1159
        %1767 = vmatprep.subr.mxu0 0.0
        %1768 = vmatpush1.msra.mxu0 %v1158
        %1769 = vmatprep.subr.mxu0 0.0
        %1770 = vmatpush1.msra.mxu0 %v1157
        %1771 = vmatprep.subr.mxu0 0.0
        %1772 = vmatpush1.msra.mxu0 %v1156
        %1773 = vmatprep.subr.mxu0 0.0
        %1774 = vmatpush1.msra.mxu0 %v1155
        %1775 = vmatprep.subr.mxu0 0.0
        %1776 = vmatpush1.msra.mxu0 %v1154
        %1777 = vmatprep.subr.mxu0 0.0
        %1778 = vmatpush1.msra.mxu0 %v1153
        %1779 = vmatprep.subr.mxu0 0.0
        %1780 = vmatpush2.msra.mxu0 0.0
        %1781 = vmatprep.subr.mxu0 0.0
        %1782 = vmatpush2.msra.mxu0 0.0
        %1783 = vmatprep.subr.mxu0 0.0
        %1784 = vmatpush2.msra.mxu0 0.0
        %1785 = vmatprep.subr.mxu0 0.0
        %1786 = vmatpush2.msra.mxu0 0.0
        %1787 = vmatprep.subr.mxu0 0.0
        %1788 = vmatpush2.msra.mxu0 0.0
        %1789 = vmatprep.subr.mxu0 0.0
        %1790 = vmatpush2.msra.mxu0 0.0
        %1791 = vmatprep.subr.mxu0 0.0
        %1792 = vmatpush2.msra.mxu0 0.0
        %1793 = vmatprep.subr.mxu0 0.0
        %1794 = vmatpush2.msra.mxu0 0.0
        %1795 = vmatprep.subr.mxu0 0.0
        %1796 = vmatpush2.msra.mxu0 0.0
        %1797 = vmatprep.subr.mxu0 0.0
        %1798 = vmatpush2.msra.mxu0 0.0
        %1799 = vmatprep.subr.mxu0 0.0
        %1800 = vmatpush2.msra.mxu0 0.0
        %1801 = vmatprep.subr.mxu0 0.0
        %1802 = vmatpush2.msra.mxu0 0.0
        %1803 = vmatprep.subr.mxu0 0.0
        %1804 = vmatpush2.msra.mxu0 0.0
        %1805 = vmatprep.subr.mxu0 0.0
        %1806 = vmatpush2.msra.mxu0 0.0
        %1807 = vmatprep.subr.mxu0 0.0
        %1808 = vmatpush2.msra.mxu0 0.0
        %1809 = vmatprep.subr.mxu0 0.0
        %1810 = vmatpush2.msra.mxu0 0.0
        %1811 = vmatprep.mubr.f32.mxu0 0.0
        %1812 = vmatmul.mubr.f32.gmra.mxu0 %v1603
        %v1813 = vpop.f32.mrf.mxu0
        %v1814 = vadd.f32 0.0, %v1813
        %v1815 = vpop.f32.mrf.mxu0
        %1816 = vdwg.mxu0
        %v1817 = vmax.f32 %v1746, %v1814
        %v1818 = vld [vmem:[%s6] sm:$0xf]
        %vm1819 = vcmask 56320
        %v1821 = vsel %vm1819, %v1818, 0
        %vm1823 = vcmask 1046528
        %v1825 = vsel %vm1823, %v1817, 0
        %1827 = vmatprep.subr.mxu0 0.0
        %1828 = vmatpush1.msra.mxu0 0.0
        %1829 = vmatprep.subr.mxu0 0.0
        %1830 = vmatpush1.msra.mxu0 0.0
        %1831 = vmatprep.subr.mxu0 0.0
        %1832 = vmatpush1.msra.mxu0 0.0
        %1833 = vmatprep.subr.mxu0 0.0
        %1834 = vmatpush1.msra.mxu0 0.0
        %1835 = vmatprep.subr.mxu0 0.0
        %1836 = vmatpush1.msra.mxu0 0.0
        %1837 = vmatprep.subr.mxu0 0.0
        %1838 = vmatpush1.msra.mxu0 0.0
        %1839 = vmatprep.subr.mxu0 0.0
        %1840 = vmatpush1.msra.mxu0 0.0
        %1841 = vmatprep.subr.mxu0 0.0
        %1842 = vmatpush1.msra.mxu0 0.0
        %1843 = vmatprep.subr.mxu0 0.0
        %1844 = vmatpush1.msra.mxu0 0.0
        %1845 = vmatprep.subr.mxu0 0.0
        %1846 = vmatpush1.msra.mxu0 0.0
        %1847 = vmatprep.subr.mxu0 0.0
        %1848 = vmatpush1.msra.mxu0 0.0
        %1849 = vmatprep.subr.mxu0 0.0
        %1850 = vmatpush1.msra.mxu0 0.0
        %1851 = vmatprep.subr.mxu0 0.0
        %1852 = vmatpush1.msra.mxu0 0.0
        %1853 = vmatprep.subr.mxu0 0.0
        %1854 = vmatpush1.msra.mxu0 0.0
        %1855 = vmatprep.subr.mxu0 0.0
        %1856 = vmatpush1.msra.mxu0 0.0
        %1857 = vmatprep.subr.mxu0 0.0
        %1858 = vmatpush1.msra.mxu0 %v1825
        %1859 = vmatprep.subr.mxu0 0.0
        %1860 = vmatpush2.msra.mxu0 0.0
        %1861 = vmatprep.subr.mxu0 0.0
        %1862 = vmatpush2.msra.mxu0 0.0
        %1863 = vmatprep.subr.mxu0 0.0
        %1864 = vmatpush2.msra.mxu0 0.0
        %1865 = vmatprep.subr.mxu0 0.0
        %1866 = vmatpush2.msra.mxu0 0.0
        %1867 = vmatprep.subr.mxu0 0.0
        %1868 = vmatpush2.msra.mxu0 0.0
        %1869 = vmatprep.subr.mxu0 0.0
        %1870 = vmatpush2.msra.mxu0 0.0
        %1871 = vmatprep.subr.mxu0 0.0
        %1872 = vmatpush2.msra.mxu0 0.0
        %1873 = vmatprep.subr.mxu0 0.0
        %1874 = vmatpush2.msra.mxu0 0.0
        %1875 = vmatprep.subr.mxu0 0.0
        %1876 = vmatpush2.msra.mxu0 0.0
        %1877 = vmatprep.subr.mxu0 0.0
        %1878 = vmatpush2.msra.mxu0 0.0
        %1879 = vmatprep.subr.mxu0 0.0
        %1880 = vmatpush2.msra.mxu0 0.0
        %1881 = vmatprep.subr.mxu0 0.0
        %1882 = vmatpush2.msra.mxu0 0.0
        %1883 = vmatprep.subr.mxu0 0.0
        %1884 = vmatpush2.msra.mxu0 0.0
        %1885 = vmatprep.subr.mxu0 0.0
        %1886 = vmatpush2.msra.mxu0 0.0
        %1887 = vmatprep.subr.mxu0 0.0
        %1888 = vmatpush2.msra.mxu0 0.0
        %1889 = vmatprep.subr.mxu0 0.0
        %1890 = vmatpush2.msra.mxu0 0.0
        %1891 = vmatprep.mubr.f32.mxu0 0.0
        %1892 = vmatmul.mubr.f32.gmra.mxu0 %v1821
        %v1893 = vpop.f32.mrf.mxu0
        %v1894 = vadd.f32 0.0, %v1893
        %v1895 = vpop.f32.mrf.mxu0
        %1896 = vdwg.mxu0
        %v1897 = vld [vmem:[%s7] sm:$0xff]
        %v1898 = vld [vmem:[%s7 + $0x8] sm:$0xff]
        %v1899 = vld [vmem:[%s7 + $0x10] sm:$0xff]
        %v1900 = vld [vmem:[%s7 + $0x18] sm:$0xff]
        %v1901 = vld [vmem:[%s7 + $0x20] sm:$0xff]
        %v1902 = vld [vmem:[%s7 + $0x28] sm:$0x3]
        %s1903 = scalar_lea.vmem %s6, 4
        %v1904 = vld [vmem:[%s1903] sm:$0xf]
        %v1906 = vsel %vm1819, %v1904, 0
        %1908 = vmatprep.subr.mxu0 0.0
        %1909 = vmatpush1.msra.mxu0 0.0
        %1910 = vmatprep.subr.mxu0 0.0
        %1911 = vmatpush1.msra.mxu0 0.0
        %1912 = vmatprep.subr.mxu0 0.0
        %1913 = vmatpush1.msra.mxu0 0.0
        %1914 = vmatprep.subr.mxu0 0.0
        %1915 = vmatpush1.msra.mxu0 0.0
        %1916 = vmatprep.subr.mxu0 0.0
        %1917 = vmatpush1.msra.mxu0 0.0
        %1918 = vmatprep.subr.mxu0 0.0
        %1919 = vmatpush1.msra.mxu0 0.0
        %1920 = vmatprep.subr.mxu0 0.0
        %1921 = vmatpush1.msra.mxu0 0.0
        %1922 = vmatprep.subr.mxu0 0.0
        %1923 = vmatpush1.msra.mxu0 0.0
        %1924 = vmatprep.subr.mxu0 0.0
        %1925 = vmatpush1.msra.mxu0 0.0
        %1926 = vmatprep.subr.mxu0 0.0
        %1927 = vmatpush1.msra.mxu0 0.0
        %1928 = vmatprep.subr.mxu0 0.0
        %1929 = vmatpush1.msra.mxu0 0.0
        %1930 = vmatprep.subr.mxu0 0.0
        %1931 = vmatpush1.msra.mxu0 0.0
        %1932 = vmatprep.subr.mxu0 0.0
        %1933 = vmatpush1.msra.mxu0 0.0
        %1934 = vmatprep.subr.mxu0 0.0
        %1935 = vmatpush1.msra.mxu0 0.0
        %1936 = vmatprep.subr.mxu0 0.0
        %1937 = vmatpush1.msra.mxu0 0.0
        %1938 = vmatprep.subr.mxu0 0.0
        %1939 = vmatpush1.msra.mxu0 %v1825
        %1940 = vmatprep.subr.mxu0 0.0
        %1941 = vmatpush2.msra.mxu0 0.0
        %1942 = vmatprep.subr.mxu0 0.0
        %1943 = vmatpush2.msra.mxu0 0.0
        %1944 = vmatprep.subr.mxu0 0.0
        %1945 = vmatpush2.msra.mxu0 0.0
        %1946 = vmatprep.subr.mxu0 0.0
        %1947 = vmatpush2.msra.mxu0 0.0
        %1948 = vmatprep.subr.mxu0 0.0
        %1949 = vmatpush2.msra.mxu0 0.0
        %1950 = vmatprep.subr.mxu0 0.0
        %1951 = vmatpush2.msra.mxu0 0.0
        %1952 = vmatprep.subr.mxu0 0.0
        %1953 = vmatpush2.msra.mxu0 0.0
        %1954 = vmatprep.subr.mxu0 0.0
        %1955 = vmatpush2.msra.mxu0 0.0
        %1956 = vmatprep.subr.mxu0 0.0
        %1957 = vmatpush2.msra.mxu0 0.0
        %1958 = vmatprep.subr.mxu0 0.0
        %1959 = vmatpush2.msra.mxu0 0.0
        %1960 = vmatprep.subr.mxu0 0.0
        %1961 = vmatpush2.msra.mxu0 0.0
        %1962 = vmatprep.subr.mxu0 0.0
        %1963 = vmatpush2.msra.mxu0 0.0
        %1964 = vmatprep.subr.mxu0 0.0
        %1965 = vmatpush2.msra.mxu0 0.0
        %1966 = vmatprep.subr.mxu0 0.0
        %1967 = vmatpush2.msra.mxu0 0.0
        %1968 = vmatprep.subr.mxu0 0.0
        %1969 = vmatpush2.msra.mxu0 0.0
        %1970 = vmatprep.subr.mxu0 0.0
        %1971 = vmatpush2.msra.mxu0 0.0
        %1972 = vmatprep.mubr.f32.mxu0 0.0
        %1973 = vmatmul.mubr.f32.gmra.mxu0 %v1906
        %v1974 = vpop.f32.mrf.mxu0
        %v1975 = vadd.f32 0.0, %v1974
        %v1976 = vpop.f32.mrf.mxu0
        %1977 = vdwg.mxu0
        %s1978 = scalar_lea.vmem %s7, 48
        %v1979 = vld [vmem:[%s1978] sm:$0xff]
        %v1980 = vld [vmem:[%s1978 + $0x8] sm:$0xff]
        %v1981 = vld [vmem:[%s1978 + $0x10] sm:$0xff]
        %v1982 = vld [vmem:[%s1978 + $0x18] sm:$0xff]
        %v1983 = vld [vmem:[%s1978 + $0x20] sm:$0xff]
        %v1984 = vld [vmem:[%s1978 + $0x28] sm:$0x3]
        %vm1985 = vcmask 343040
        %v1987 = vsel %vm1985, %v1975, 0
        %vm1989 = vcmask 1041408
        %v1991 = vsel %vm1989, %v1984, 0
        %1993 = vmatprep.subr.mxu0 0.0
        %1994 = vmatpush1.msra.mxu0 0.0
        %1995 = vmatprep.subr.mxu0 0.0
        %1996 = vmatpush1.msra.mxu0 0.0
        %1997 = vmatprep.subr.mxu0 0.0
        %1998 = vmatpush1.msra.mxu0 0.0
        %1999 = vmatprep.subr.mxu0 0.0
        %2000 = vmatpush1.msra.mxu0 0.0
        %2001 = vmatprep.subr.mxu0 0.0
        %2002 = vmatpush1.msra.mxu0 0.0
        %2003 = vmatprep.subr.mxu0 0.0
        %2004 = vmatpush1.msra.mxu0 0.0
        %2005 = vmatprep.subr.mxu0 0.0
        %2006 = vmatpush1.msra.mxu0 0.0
        %2007 = vmatprep.subr.mxu0 0.0
        %2008 = vmatpush1.msra.mxu0 0.0
        %2009 = vmatprep.subr.mxu0 0.0
        %2010 = vmatpush1.msra.mxu0 0.0
        %2011 = vmatprep.subr.mxu0 0.0
        %2012 = vmatpush1.msra.mxu0 0.0
        %2013 = vmatprep.subr.mxu0 0.0
        %2014 = vmatpush1.msra.mxu0 %v1991
        %2015 = vmatprep.subr.mxu0 0.0
        %2016 = vmatpush1.msra.mxu0 %v1983
        %2017 = vmatprep.subr.mxu0 0.0
        %2018 = vmatpush1.msra.mxu0 %v1982
        %2019 = vmatprep.subr.mxu0 0.0
        %2020 = vmatpush1.msra.mxu0 %v1981
        %2021 = vmatprep.subr.mxu0 0.0
        %2022 = vmatpush1.msra.mxu0 %v1980
        %2023 = vmatprep.subr.mxu0 0.0
        %2024 = vmatpush1.msra.mxu0 %v1979
        %2025 = vmatprep.subr.mxu0 0.0
        %2026 = vmatpush2.msra.mxu0 0.0
        %2027 = vmatprep.subr.mxu0 0.0
        %2028 = vmatpush2.msra.mxu0 0.0
        %2029 = vmatprep.subr.mxu0 0.0
        %2030 = vmatpush2.msra.mxu0 0.0
        %2031 = vmatprep.subr.mxu0 0.0
        %2032 = vmatpush2.msra.mxu0 0.0
        %2033 = vmatprep.subr.mxu0 0.0
        %2034 = vmatpush2.msra.mxu0 0.0
        %2035 = vmatprep.subr.mxu0 0.0
        %2036 = vmatpush2.msra.mxu0 0.0
        %2037 = vmatprep.subr.mxu0 0.0
        %2038 = vmatpush2.msra.mxu0 0.0
        %2039 = vmatprep.subr.mxu0 0.0
        %2040 = vmatpush2.msra.mxu0 0.0
        %2041 = vmatprep.subr.mxu0 0.0
        %2042 = vmatpush2.msra.mxu0 0.0
        %2043 = vmatprep.subr.mxu0 0.0
        %2044 = vmatpush2.msra.mxu0 0.0
        %2045 = vmatprep.subr.mxu0 0.0
        %2046 = vmatpush2.msra.mxu0 0.0
        %2047 = vmatprep.subr.mxu0 0.0
        %2048 = vmatpush2.msra.mxu0 0.0
        %2049 = vmatprep.subr.mxu0 0.0
        %2050 = vmatpush2.msra.mxu0 0.0
        %2051 = vmatprep.subr.mxu0 0.0
        %2052 = vmatpush2.msra.mxu0 0.0
        %2053 = vmatprep.subr.mxu0 0.0
        %2054 = vmatpush2.msra.mxu0 0.0
        %2055 = vmatprep.subr.mxu0 0.0
        %2056 = vmatpush2.msra.mxu0 0.0
        %2057 = vmatprep.mubr.f32.mxu0 0.0
        %2058 = vmatmul.mubr.f32.gmra.mxu0 %v1987
        %v2059 = vpop.f32.mrf.mxu0
        %v2060 = vadd.f32 0.0, %v2059
        %v2061 = vpop.f32.mrf.mxu0
        %2062 = vdwg.mxu0
        %v2064 = vsel %vm1985, %v1894, 0
        %v2067 = vsel %vm1989, %v1902, 0
        %2069 = vmatprep.subr.mxu0 0.0
        %2070 = vmatpush1.msra.mxu0 0.0
        %2071 = vmatprep.subr.mxu0 0.0
        %2072 = vmatpush1.msra.mxu0 0.0
        %2073 = vmatprep.subr.mxu0 0.0
        %2074 = vmatpush1.msra.mxu0 0.0
        %2075 = vmatprep.subr.mxu0 0.0
        %2076 = vmatpush1.msra.mxu0 0.0
        %2077 = vmatprep.subr.mxu0 0.0
        %2078 = vmatpush1.msra.mxu0 0.0
        %2079 = vmatprep.subr.mxu0 0.0
        %2080 = vmatpush1.msra.mxu0 0.0
        %2081 = vmatprep.subr.mxu0 0.0
        %2082 = vmatpush1.msra.mxu0 0.0
        %2083 = vmatprep.subr.mxu0 0.0
        %2084 = vmatpush1.msra.mxu0 0.0
        %2085 = vmatprep.subr.mxu0 0.0
        %2086 = vmatpush1.msra.mxu0 0.0
        %2087 = vmatprep.subr.mxu0 0.0
        %2088 = vmatpush1.msra.mxu0 0.0
        %2089 = vmatprep.subr.mxu0 0.0
        %2090 = vmatpush1.msra.mxu0 %v2067
        %2091 = vmatprep.subr.mxu0 0.0
        %2092 = vmatpush1.msra.mxu0 %v1901
        %2093 = vmatprep.subr.mxu0 0.0
        %2094 = vmatpush1.msra.mxu0 %v1900
        %2095 = vmatprep.subr.mxu0 0.0
        %2096 = vmatpush1.msra.mxu0 %v1899
        %2097 = vmatprep.subr.mxu0 0.0
        %2098 = vmatpush1.msra.mxu0 %v1898
        %2099 = vmatprep.subr.mxu0 0.0
        %2100 = vmatpush1.msra.mxu0 %v1897
        %2101 = vmatprep.subr.mxu0 0.0
        %2102 = vmatpush2.msra.mxu0 0.0
        %2103 = vmatprep.subr.mxu0 0.0
        %2104 = vmatpush2.msra.mxu0 0.0
        %2105 = vmatprep.subr.mxu0 0.0
        %2106 = vmatpush2.msra.mxu0 0.0
        %2107 = vmatprep.subr.mxu0 0.0
        %2108 = vmatpush2.msra.mxu0 0.0
        %2109 = vmatprep.subr.mxu0 0.0
        %2110 = vmatpush2.msra.mxu0 0.0
        %2111 = vmatprep.subr.mxu0 0.0
        %2112 = vmatpush2.msra.mxu0 0.0
        %2113 = vmatprep.subr.mxu0 0.0
        %2114 = vmatpush2.msra.mxu0 0.0
        %2115 = vmatprep.subr.mxu0 0.0
        %2116 = vmatpush2.msra.mxu0 0.0
        %2117 = vmatprep.subr.mxu0 0.0
        %2118 = vmatpush2.msra.mxu0 0.0
        %2119 = vmatprep.subr.mxu0 0.0
        %2120 = vmatpush2.msra.mxu0 0.0
        %2121 = vmatprep.subr.mxu0 0.0
        %2122 = vmatpush2.msra.mxu0 0.0
        %2123 = vmatprep.subr.mxu0 0.0
        %2124 = vmatpush2.msra.mxu0 0.0
        %2125 = vmatprep.subr.mxu0 0.0
        %2126 = vmatpush2.msra.mxu0 0.0
        %2127 = vmatprep.subr.mxu0 0.0
        %2128 = vmatpush2.msra.mxu0 0.0
        %2129 = vmatprep.subr.mxu0 0.0
        %2130 = vmatpush2.msra.mxu0 0.0
        %2131 = vmatprep.subr.mxu0 0.0
        %2132 = vmatpush2.msra.mxu0 0.0
        %2133 = vmatprep.mubr.f32.mxu0 0.0
        %2134 = vmatmul.mubr.f32.gmra.mxu0 %v2064
        %v2135 = vpop.f32.mrf.mxu0
        %v2136 = vadd.f32 %v2060, %v2135
        %v2137 = vpop.f32.mrf.mxu0
        %2138 = vdwg.mxu0
        %s2139 = scalar_lea.vmem %s6, 8
        %v2140 = vld [vmem:[%s2139] sm:$0xf]
        %v2142 = vsel %vm1819, %v2140, 0
        %2144 = vmatprep.subr.mxu0 0.0
        %2145 = vmatpush1.msra.mxu0 0.0
        %2146 = vmatprep.subr.mxu0 0.0
        %2147 = vmatpush1.msra.mxu0 0.0
        %2148 = vmatprep.subr.mxu0 0.0
        %2149 = vmatpush1.msra.mxu0 0.0
        %2150 = vmatprep.subr.mxu0 0.0
        %2151 = vmatpush1.msra.mxu0 0.0
        %2152 = vmatprep.subr.mxu0 0.0
        %2153 = vmatpush1.msra.mxu0 0.0
        %2154 = vmatprep.subr.mxu0 0.0
        %2155 = vmatpush1.msra.mxu0 0.0
        %2156 = vmatprep.subr.mxu0 0.0
        %2157 = vmatpush1.msra.mxu0 0.0
        %2158 = vmatprep.subr.mxu0 0.0
        %2159 = vmatpush1.msra.mxu0 0.0
        %2160 = vmatprep.subr.mxu0 0.0
        %2161 = vmatpush1.msra.mxu0 0.0
        %2162 = vmatprep.subr.mxu0 0.0
        %2163 = vmatpush1.msra.mxu0 0.0
        %2164 = vmatprep.subr.mxu0 0.0
        %2165 = vmatpush1.msra.mxu0 0.0
        %2166 = vmatprep.subr.mxu0 0.0
        %2167 = vmatpush1.msra.mxu0 0.0
        %2168 = vmatprep.subr.mxu0 0.0
        %2169 = vmatpush1.msra.mxu0 0.0
        %2170 = vmatprep.subr.mxu0 0.0
        %2171 = vmatpush1.msra.mxu0 0.0
        %2172 = vmatprep.subr.mxu0 0.0
        %2173 = vmatpush1.msra.mxu0 0.0
        %2174 = vmatprep.subr.mxu0 0.0
        %2175 = vmatpush1.msra.mxu0 %v1825
        %2176 = vmatprep.subr.mxu0 0.0
        %2177 = vmatpush2.msra.mxu0 0.0
        %2178 = vmatprep.subr.mxu0 0.0
        %2179 = vmatpush2.msra.mxu0 0.0
        %2180 = vmatprep.subr.mxu0 0.0
        %2181 = vmatpush2.msra.mxu0 0.0
        %2182 = vmatprep.subr.mxu0 0.0
        %2183 = vmatpush2.msra.mxu0 0.0
        %2184 = vmatprep.subr.mxu0 0.0
        %2185 = vmatpush2.msra.mxu0 0.0
        %2186 = vmatprep.subr.mxu0 0.0
        %2187 = vmatpush2.msra.mxu0 0.0
        %2188 = vmatprep.subr.mxu0 0.0
        %2189 = vmatpush2.msra.mxu0 0.0
        %2190 = vmatprep.subr.mxu0 0.0
        %2191 = vmatpush2.msra.mxu0 0.0
        %2192 = vmatprep.subr.mxu0 0.0
        %2193 = vmatpush2.msra.mxu0 0.0
        %2194 = vmatprep.subr.mxu0 0.0
        %2195 = vmatpush2.msra.mxu0 0.0
        %2196 = vmatprep.subr.mxu0 0.0
        %2197 = vmatpush2.msra.mxu0 0.0
        %2198 = vmatprep.subr.mxu0 0.0
        %2199 = vmatpush2.msra.mxu0 0.0
        %2200 = vmatprep.subr.mxu0 0.0
        %2201 = vmatpush2.msra.mxu0 0.0
        %2202 = vmatprep.subr.mxu0 0.0
        %2203 = vmatpush2.msra.mxu0 0.0
        %2204 = vmatprep.subr.mxu0 0.0
        %2205 = vmatpush2.msra.mxu0 0.0
        %2206 = vmatprep.subr.mxu0 0.0
        %2207 = vmatpush2.msra.mxu0 0.0
        %2208 = vmatprep.mubr.f32.mxu0 0.0
        %2209 = vmatmul.mubr.f32.gmra.mxu0 %v2142
        %v2210 = vpop.f32.mrf.mxu0
        %v2211 = vadd.f32 0.0, %v2210
        %v2212 = vpop.f32.mrf.mxu0
        %2213 = vdwg.mxu0
        %s2214 = scalar_lea.vmem %s7, 96
        %v2215 = vld [vmem:[%s2214] sm:$0xff]
        %v2216 = vld [vmem:[%s2214 + $0x8] sm:$0xff]
        %v2217 = vld [vmem:[%s2214 + $0x10] sm:$0xff]
        %v2218 = vld [vmem:[%s2214 + $0x18] sm:$0xff]
        %v2219 = vld [vmem:[%s2214 + $0x20] sm:$0xff]
        %v2220 = vld [vmem:[%s2214 + $0x28] sm:$0x3]
        %v2222 = vsel %vm1985, %v2211, 0
        %v2225 = vsel %vm1989, %v2220, 0
        %2227 = vmatprep.subr.mxu0 0.0
        %2228 = vmatpush1.msra.mxu0 0.0
        %2229 = vmatprep.subr.mxu0 0.0
        %2230 = vmatpush1.msra.mxu0 0.0
        %2231 = vmatprep.subr.mxu0 0.0
        %2232 = vmatpush1.msra.mxu0 0.0
        %2233 = vmatprep.subr.mxu0 0.0
        %2234 = vmatpush1.msra.mxu0 0.0
        %2235 = vmatprep.subr.mxu0 0.0
        %2236 = vmatpush1.msra.mxu0 0.0
        %2237 = vmatprep.subr.mxu0 0.0
        %2238 = vmatpush1.msra.mxu0 0.0
        %2239 = vmatprep.subr.mxu0 0.0
        %2240 = vmatpush1.msra.mxu0 0.0
        %2241 = vmatprep.subr.mxu0 0.0
        %2242 = vmatpush1.msra.mxu0 0.0
        %2243 = vmatprep.subr.mxu0 0.0
        %2244 = vmatpush1.msra.mxu0 0.0
        %2245 = vmatprep.subr.mxu0 0.0
        %2246 = vmatpush1.msra.mxu0 0.0
        %2247 = vmatprep.subr.mxu0 0.0
        %2248 = vmatpush1.msra.mxu0 %v2225
        %2249 = vmatprep.subr.mxu0 0.0
        %2250 = vmatpush1.msra.mxu0 %v2219
        %2251 = vmatprep.subr.mxu0 0.0
        %2252 = vmatpush1.msra.mxu0 %v2218
        %2253 = vmatprep.subr.mxu0 0.0
        %2254 = vmatpush1.msra.mxu0 %v2217
        %2255 = vmatprep.subr.mxu0 0.0
        %2256 = vmatpush1.msra.mxu0 %v2216
        %2257 = vmatprep.subr.mxu0 0.0
        %2258 = vmatpush1.msra.mxu0 %v2215
        %2259 = vmatprep.subr.mxu0 0.0
        %2260 = vmatpush2.msra.mxu0 0.0
        %2261 = vmatprep.subr.mxu0 0.0
        %2262 = vmatpush2.msra.mxu0 0.0
        %2263 = vmatprep.subr.mxu0 0.0
        %2264 = vmatpush2.msra.mxu0 0.0
        %2265 = vmatprep.subr.mxu0 0.0
        %2266 = vmatpush2.msra.mxu0 0.0
        %2267 = vmatprep.subr.mxu0 0.0
        %2268 = vmatpush2.msra.mxu0 0.0
        %2269 = vmatprep.subr.mxu0 0.0
        %2270 = vmatpush2.msra.mxu0 0.0
        %2271 = vmatprep.subr.mxu0 0.0
        %2272 = vmatpush2.msra.mxu0 0.0
        %2273 = vmatprep.subr.mxu0 0.0
        %2274 = vmatpush2.msra.mxu0 0.0
        %2275 = vmatprep.subr.mxu0 0.0
        %2276 = vmatpush2.msra.mxu0 0.0
        %2277 = vmatprep.subr.mxu0 0.0
        %2278 = vmatpush2.msra.mxu0 0.0
        %2279 = vmatprep.subr.mxu0 0.0
        %2280 = vmatpush2.msra.mxu0 0.0
        %2281 = vmatprep.subr.mxu0 0.0
        %2282 = vmatpush2.msra.mxu0 0.0
        %2283 = vmatprep.subr.mxu0 0.0
        %2284 = vmatpush2.msra.mxu0 0.0
        %2285 = vmatprep.subr.mxu0 0.0
        %2286 = vmatpush2.msra.mxu0 0.0
        %2287 = vmatprep.subr.mxu0 0.0
        %2288 = vmatpush2.msra.mxu0 0.0
        %2289 = vmatprep.subr.mxu0 0.0
        %2290 = vmatpush2.msra.mxu0 0.0
        %2291 = vmatprep.mubr.f32.mxu0 0.0
        %2292 = vmatmul.mubr.f32.gmra.mxu0 %v2222
        %v2293 = vpop.f32.mrf.mxu0
        %v2294 = vadd.f32 0.0, %v2293
        %v2295 = vpop.f32.mrf.mxu0
        %2296 = vdwg.mxu0
        %v2297 = vadd.f32 %v2136, %v2294
        %v2298 = vld [vmem:[%s8] sm:$0x1]
        %v2300 = vlaneseq
        %v2301 = vshrl.u32 %v2300, 7
        %v2302 = vsub.s32 0, %v2301
        %v2303 = vrot.slane %v2298, %v2302
        %v2305 = vadd.f32 %v2297, %v2303
        %v2306 = vmax.f32 %v2305, 0.0
        %v2307 = vld [vmem:[%s9] sm:$0xff]
        %v2308 = vld [vmem:[%s9 + $0x8] sm:$0xff]
        %v2309 = vld [vmem:[%s9 + $0x10] sm:$0xff]
        %v2310 = vld [vmem:[%s9 + $0x18] sm:$0xff]
        %v2311 = vld [vmem:[%s9 + $0x20] sm:$0xff]
        %v2312 = vld [vmem:[%s9 + $0x28] sm:$0xff]
        %vm2313 = vcmask 392192
        %v2315 = vsel %vm2313, %v2306, 0
        %2317 = vmatprep.subr.mxu0 0.0
        %2318 = vmatpush1.msra.mxu0 0.0
        %2319 = vmatprep.subr.mxu0 0.0
        %2320 = vmatpush1.msra.mxu0 0.0
        %2321 = vmatprep.subr.mxu0 0.0
        %2322 = vmatpush1.msra.mxu0 0.0
        %2323 = vmatprep.subr.mxu0 0.0
        %2324 = vmatpush1.msra.mxu0 0.0
        %2325 = vmatprep.subr.mxu0 0.0
        %2326 = vmatpush1.msra.mxu0 0.0
        %2327 = vmatprep.subr.mxu0 0.0
        %2328 = vmatpush1.msra.mxu0 0.0
        %2329 = vmatprep.subr.mxu0 0.0
        %2330 = vmatpush1.msra.mxu0 0.0
        %2331 = vmatprep.subr.mxu0 0.0
        %2332 = vmatpush1.msra.mxu0 0.0
        %2333 = vmatprep.subr.mxu0 0.0
        %2334 = vmatpush1.msra.mxu0 0.0
        %2335 = vmatprep.subr.mxu0 0.0
        %2336 = vmatpush1.msra.mxu0 0.0
        %2337 = vmatprep.subr.mxu0 0.0
        %2338 = vmatpush1.msra.mxu0 %v2312
        %2339 = vmatprep.subr.mxu0 0.0
        %2340 = vmatpush1.msra.mxu0 %v2311
        %2341 = vmatprep.subr.mxu0 0.0
        %2342 = vmatpush1.msra.mxu0 %v2310
        %2343 = vmatprep.subr.mxu0 0.0
        %2344 = vmatpush1.msra.mxu0 %v2309
        %2345 = vmatprep.subr.mxu0 0.0
        %2346 = vmatpush1.msra.mxu0 %v2308
        %2347 = vmatprep.subr.mxu0 0.0
        %2348 = vmatpush1.msra.mxu0 %v2307
        %2349 = vmatprep.subr.mxu0 0.0
        %2350 = vmatpush2.msra.mxu0 0.0
        %2351 = vmatprep.subr.mxu0 0.0
        %2352 = vmatpush2.msra.mxu0 0.0
        %2353 = vmatprep.subr.mxu0 0.0
        %2354 = vmatpush2.msra.mxu0 0.0
        %2355 = vmatprep.subr.mxu0 0.0
        %2356 = vmatpush2.msra.mxu0 0.0
        %2357 = vmatprep.subr.mxu0 0.0
        %2358 = vmatpush2.msra.mxu0 0.0
        %2359 = vmatprep.subr.mxu0 0.0
        %2360 = vmatpush2.msra.mxu0 0.0
        %2361 = vmatprep.subr.mxu0 0.0
        %2362 = vmatpush2.msra.mxu0 0.0
        %2363 = vmatprep.subr.mxu0 0.0
        %2364 = vmatpush2.msra.mxu0 0.0
        %2365 = vmatprep.subr.mxu0 0.0
        %2366 = vmatpush2.msra.mxu0 0.0
        %2367 = vmatprep.subr.mxu0 0.0
        %2368 = vmatpush2.msra.mxu0 0.0
        %2369 = vmatprep.subr.mxu0 0.0
        %2370 = vmatpush2.msra.mxu0 0.0
        %2371 = vmatprep.subr.mxu0 0.0
        %2372 = vmatpush2.msra.mxu0 0.0
        %2373 = vmatprep.subr.mxu0 0.0
        %2374 = vmatpush2.msra.mxu0 0.0
        %2375 = vmatprep.subr.mxu0 0.0
        %2376 = vmatpush2.msra.mxu0 0.0
        %2377 = vmatprep.subr.mxu0 0.0
        %2378 = vmatpush2.msra.mxu0 0.0
        %2379 = vmatprep.subr.mxu0 0.0
        %2380 = vmatpush2.msra.mxu0 0.0
        %2381 = vmatprep.mubr.f32.mxu0 0.0
        %2382 = vmatmul.mubr.f32.gmra.mxu0 %v2315
        %v2383 = vpop.f32.mrf.mxu0
        %v2384 = vadd.f32 0.0, %v2383
        %v2385 = vpop.f32.mrf.mxu0
        %2386 = vdwg.mxu0
        %s2387 = scalar_lea.vmem %s9, 48
        %v2388 = vld [vmem:[%s2387] sm:$0xff]
        %v2389 = vld [vmem:[%s2387 + $0x8] sm:$0xff]
        %v2390 = vld [vmem:[%s2387 + $0x10] sm:$0xff]
        %v2391 = vld [vmem:[%s2387 + $0x18] sm:$0xff]
        %v2392 = vld [vmem:[%s2387 + $0x20] sm:$0xff]
        %v2393 = vld [vmem:[%s2387 + $0x28] sm:$0xff]
        %2394 = vmatprep.subr.mxu0 0.0
        %2395 = vmatpush1.msra.mxu0 0.0
        %2396 = vmatprep.subr.mxu0 0.0
        %2397 = vmatpush1.msra.mxu0 0.0
        %2398 = vmatprep.subr.mxu0 0.0
        %2399 = vmatpush1.msra.mxu0 0.0
        %2400 = vmatprep.subr.mxu0 0.0
        %2401 = vmatpush1.msra.mxu0 0.0
        %2402 = vmatprep.subr.mxu0 0.0
        %2403 = vmatpush1.msra.mxu0 0.0
        %2404 = vmatprep.subr.mxu0 0.0
        %2405 = vmatpush1.msra.mxu0 0.0
        %2406 = vmatprep.subr.mxu0 0.0
        %2407 = vmatpush1.msra.mxu0 0.0
        %2408 = vmatprep.subr.mxu0 0.0
        %2409 = vmatpush1.msra.mxu0 0.0
        %2410 = vmatprep.subr.mxu0 0.0
        %2411 = vmatpush1.msra.mxu0 0.0
        %2412 = vmatprep.subr.mxu0 0.0
        %2413 = vmatpush1.msra.mxu0 0.0
        %2414 = vmatprep.subr.mxu0 0.0
        %2415 = vmatpush1.msra.mxu0 %v2393
        %2416 = vmatprep.subr.mxu0 0.0
        %2417 = vmatpush1.msra.mxu0 %v2392
        %2418 = vmatprep.subr.mxu0 0.0
        %2419 = vmatpush1.msra.mxu0 %v2391
        %2420 = vmatprep.subr.mxu0 0.0
        %2421 = vmatpush1.msra.mxu0 %v2390
        %2422 = vmatprep.subr.mxu0 0.0
        %2423 = vmatpush1.msra.mxu0 %v2389
        %2424 = vmatprep.subr.mxu0 0.0
        %2425 = vmatpush1.msra.mxu0 %v2388
        %2426 = vmatprep.subr.mxu0 0.0
        %2427 = vmatpush2.msra.mxu0 0.0
        %2428 = vmatprep.subr.mxu0 0.0
        %2429 = vmatpush2.msra.mxu0 0.0
        %2430 = vmatprep.subr.mxu0 0.0
        %2431 = vmatpush2.msra.mxu0 0.0
        %2432 = vmatprep.subr.mxu0 0.0
        %2433 = vmatpush2.msra.mxu0 0.0
        %2434 = vmatprep.subr.mxu0 0.0
        %2435 = vmatpush2.msra.mxu0 0.0
        %2436 = vmatprep.subr.mxu0 0.0
        %2437 = vmatpush2.msra.mxu0 0.0
        %2438 = vmatprep.subr.mxu0 0.0
        %2439 = vmatpush2.msra.mxu0 0.0
        %2440 = vmatprep.subr.mxu0 0.0
        %2441 = vmatpush2.msra.mxu0 0.0
        %2442 = vmatprep.subr.mxu0 0.0
        %2443 = vmatpush2.msra.mxu0 0.0
        %2444 = vmatprep.subr.mxu0 0.0
        %2445 = vmatpush2.msra.mxu0 0.0
        %2446 = vmatprep.subr.mxu0 0.0
        %2447 = vmatpush2.msra.mxu0 0.0
        %2448 = vmatprep.subr.mxu0 0.0
        %2449 = vmatpush2.msra.mxu0 0.0
        %2450 = vmatprep.subr.mxu0 0.0
        %2451 = vmatpush2.msra.mxu0 0.0
        %2452 = vmatprep.subr.mxu0 0.0
        %2453 = vmatpush2.msra.mxu0 0.0
        %2454 = vmatprep.subr.mxu0 0.0
        %2455 = vmatpush2.msra.mxu0 0.0
        %2456 = vmatprep.subr.mxu0 0.0
        %2457 = vmatpush2.msra.mxu0 0.0
        %2458 = vmatprep.mubr.f32.mxu0 0.0
        %2459 = vmatmul.mubr.f32.gmra.mxu0 %v2315
        %v2460 = vpop.f32.mrf.mxu0
        %v2461 = vadd.f32 0.0, %v2460
        %v2462 = vpop.f32.mrf.mxu0
        %2463 = vdwg.mxu0
        %v2464 = vmax.f32 %v2384, %v2461
        %s2465 = scalar_lea.vmem %s9, 96
        %v2466 = vld [vmem:[%s2465] sm:$0xff]
        %v2467 = vld [vmem:[%s2465 + $0x8] sm:$0xff]
        %v2468 = vld [vmem:[%s2465 + $0x10] sm:$0xff]
        %v2469 = vld [vmem:[%s2465 + $0x18] sm:$0xff]
        %v2470 = vld [vmem:[%s2465 + $0x20] sm:$0xff]
        %v2471 = vld [vmem:[%s2465 + $0x28] sm:$0xff]
        %2472 = vmatprep.subr.mxu0 0.0
        %2473 = vmatpush1.msra.mxu0 0.0
        %2474 = vmatprep.subr.mxu0 0.0
        %2475 = vmatpush1.msra.mxu0 0.0
        %2476 = vmatprep.subr.mxu0 0.0
        %2477 = vmatpush1.msra.mxu0 0.0
        %2478 = vmatprep.subr.mxu0 0.0
        %2479 = vmatpush1.msra.mxu0 0.0
        %2480 = vmatprep.subr.mxu0 0.0
        %2481 = vmatpush1.msra.mxu0 0.0
        %2482 = vmatprep.subr.mxu0 0.0
        %2483 = vmatpush1.msra.mxu0 0.0
        %2484 = vmatprep.subr.mxu0 0.0
        %2485 = vmatpush1.msra.mxu0 0.0
        %2486 = vmatprep.subr.mxu0 0.0
        %2487 = vmatpush1.msra.mxu0 0.0
        %2488 = vmatprep.subr.mxu0 0.0
        %2489 = vmatpush1.msra.mxu0 0.0
        %2490 = vmatprep.subr.mxu0 0.0
        %2491 = vmatpush1.msra.mxu0 0.0
        %2492 = vmatprep.subr.mxu0 0.0
        %2493 = vmatpush1.msra.mxu0 %v2471
        %2494 = vmatprep.subr.mxu0 0.0
        %2495 = vmatpush1.msra.mxu0 %v2470
        %2496 = vmatprep.subr.mxu0 0.0
        %2497 = vmatpush1.msra.mxu0 %v2469
        %2498 = vmatprep.subr.mxu0 0.0
        %2499 = vmatpush1.msra.mxu0 %v2468
        %2500 = vmatprep.subr.mxu0 0.0
        %2501 = vmatpush1.msra.mxu0 %v2467
        %2502 = vmatprep.subr.mxu0 0.0
        %2503 = vmatpush1.msra.mxu0 %v2466
        %2504 = vmatprep.subr.mxu0 0.0
        %2505 = vmatpush2.msra.mxu0 0.0
        %2506 = vmatprep.subr.mxu0 0.0
        %2507 = vmatpush2.msra.mxu0 0.0
        %2508 = vmatprep.subr.mxu0 0.0
        %2509 = vmatpush2.msra.mxu0 0.0
        %2510 = vmatprep.subr.mxu0 0.0
        %2511 = vmatpush2.msra.mxu0 0.0
        %2512 = vmatprep.subr.mxu0 0.0
        %2513 = vmatpush2.msra.mxu0 0.0
        %2514 = vmatprep.subr.mxu0 0.0
        %2515 = vmatpush2.msra.mxu0 0.0
        %2516 = vmatprep.subr.mxu0 0.0
        %2517 = vmatpush2.msra.mxu0 0.0
        %2518 = vmatprep.subr.mxu0 0.0
        %2519 = vmatpush2.msra.mxu0 0.0
        %2520 = vmatprep.subr.mxu0 0.0
        %2521 = vmatpush2.msra.mxu0 0.0
        %2522 = vmatprep.subr.mxu0 0.0
        %2523 = vmatpush2.msra.mxu0 0.0
        %2524 = vmatprep.subr.mxu0 0.0
        %2525 = vmatpush2.msra.mxu0 0.0
        %2526 = vmatprep.subr.mxu0 0.0
        %2527 = vmatpush2.msra.mxu0 0.0
        %2528 = vmatprep.subr.mxu0 0.0
        %2529 = vmatpush2.msra.mxu0 0.0
        %2530 = vmatprep.subr.mxu0 0.0
        %2531 = vmatpush2.msra.mxu0 0.0
        %2532 = vmatprep.subr.mxu0 0.0
        %2533 = vmatpush2.msra.mxu0 0.0
        %2534 = vmatprep.subr.mxu0 0.0
        %2535 = vmatpush2.msra.mxu0 0.0
        %2536 = vmatprep.mubr.f32.mxu0 0.0
        %2537 = vmatmul.mubr.f32.gmra.mxu0 %v2315
        %v2538 = vpop.f32.mrf.mxu0
        %v2539 = vadd.f32 0.0, %v2538
        %v2540 = vpop.f32.mrf.mxu0
        %2541 = vdwg.mxu0
        %v2542 = vmax.f32 %v2464, %v2539
        %vm2543 = vcmask 92160
        %v2544 = vsel %vm2543, %v2542, -inf
        %v2545 = vrot.slane %v2544, 4
        %v2546 = vmax.f32 %v2544, %v2545
        %v2547 = vrot.slane %v2546, 2
        %v2548 = vmax.f32 %v2546, %v2547
        %v2549 = vrot.slane %v2548, 1
        %v2550 = vmax.f32 %v2548, %v2549
        %vm2551 = vcmask 90112
        %2552 = vst.msk [vmem:[%s351] sm:$0x1] %vm2551, %v2550
        %s2553 = sand.u32 %s247, 1
        %s2554 = scalar_lea.sflag [#allocation3], %s2553
        %s2555 = sand.u32 %s247, 1
        %s2556 = scalar_lea.vmem [#allocation2], %s2555
        // Predicated region
        $region61: #{cnn_branch.1} parent=59 // pred_check
          %p2557 = pneg %p257
        $region62: #{cnn_branch.1} parent=59 // pred_check_branch
          %2559 = sbr.rel (%p2557) target = $region64
        $region63: #{cnn_branch.1} parent=59 // pred_region
          %s2561 = ssub.s32 16, 16
          %2562 = vsyncadd %s2554, %s2561
          %s2563 = smul.addr %s24, 16
          %s2564 = scalar_lea.hbm %s10, %s2563
          %s2566 = sshll.u32 %s2556, 4
          %s2567 = int_to_ptr.vmem [resolvable:$true] %s2566
          %2569 = dma.vmem_to_hbm [thread:$0]  %s2567, 16, %s2564, %s2554
        $region64: #{cnn_branch.1} parent=59 // pred_fallthru
          _
      $region60: #{cnn_branch.1} parent=5 // pred_fallthru
        _
      %p2570 = scmp.le.s32.totalorder 2, %s19
      // Predicated region
      $region65: #{cnn_branch.1} parent=5 // pred_check
        %p2571 = pneg %p2570
      $region66: #{cnn_branch.1} parent=5 // pred_check_branch
        %2573 = sbr.rel (%p2571) target = $region68
      $region67: #{cnn_branch.1} parent=5 // pred_region
        %s2574 = ssub.s32 %s19, 2
        // Predicated region
        $region69: #{cnn_branch.1} parent=67 // pred_check
          %p2575 = pneg %p263
        $region70: #{cnn_branch.1} parent=67 // pred_check_branch
          %2577 = sbr.rel (%p2575) target = $region72
        $region71: #{cnn_branch.1} parent=67 // pred_region
          %s2578 = sand.u32 %s248, 1
          %s2579 = scalar_lea.sflag [#allocation3], %s2578
          %s2580 = sand.u32 %s248, 1
          %s2581 = scalar_lea.vmem [#allocation2], %s2580
          %2582 = dma.done %s2579, 16
        $region72: #{cnn_branch.1} parent=67 // pred_fallthru
          _
      $region68: #{cnn_branch.1} parent=5 // pred_fallthru
        _
    $region6: #{cnn_branch.1} parent=1 // loop_footer
      %s23 = sadd.s32 1, %s19
    $region7: #{cnn_branch.1} parent=1 // loop_footer_branch
      %18 = sbr.rel target = $region3
    $region8: #{cnn_branch.1} parent=1 // loop_exit
      _
    %2583 = vsyncpa [#allocation3], 1
    %s2584 = scalar_lea.sflag [#allocation3], 1
    %2585 = vsyncpa %s2584, 1

</llo_original>
